<compile_context>
chip_gen: v6e
topology: v6e:2x2x1
jax: 0.10.0
libtpu: 0.0.40
codegen_flags: <defaults>
</compile_context>

<pallas_src>
import functools

import numpy as np
import jax
import jax.numpy as jnp
from jax import lax
from jax.experimental import pallas as pl
from jax.experimental.pallas import tpu as pltpu


def _round_up(v, m):
    return ((v + m - 1) // m) * m


def _vmem_budget_bytes():
    """Physical-VMEM-aware budget with Mosaic headroom (v5e/v6e: 128 MiB, v7x: 64 MiB)."""
    try:
        phys = int(pltpu.get_tpu_info().vmem_capacity_bytes)
    except Exception:
        phys = 64 << 20          # conservative fallback (v7x per-core physical VMEM)
    return int(min(max(phys - (8 << 20), 32 << 20), 100 << 20))


def _mmd_kernel(x_ref, sqc_ref, sqr_ref, lab_ref, grp_ref, out_ref, gram_ref, *,
                w_m, sigma, num_groups, num_classes, kernel, exp_dtype, k_mxu_dtype):
    k = pl.program_id(0)
    eps = 1e-12

    @pl.when(k == 0)
    def _init():
        gram_ref[...] = jnp.zeros_like(gram_ref)

    # ---- Hot loop: MXU push + f32 accumulate only (norms precomputed in the wrapper) ----
    xk = x_ref[...]                                        # (N, tk), bf16 or f32
    gram_ref[...] += lax.dot_general(                      # X @ X^T, f32 accumulation
        xk, xk, (((1,), (1,)), ((), ())), preferred_element_type=jnp.float32)

    n_pad = gram_ref.shape[0]
    c_pad = max(8, _round_up(num_classes, 8))

    @pl.when(k == pl.num_programs(0) - 1)
    def _epilogue():
        lab = lab_ref[...]                                 # (1, N) int32, padding = -1
        grp = grp_ref[...]                                 # (1, N) int32, padding = -1

        # One-hot class indicator R^T in (C, N) lane-dense layout (padding cols are zero).
        cls_iota = lax.broadcasted_iota(jnp.int32, (c_pad, n_pad), 0)
        RT = (cls_iota == lab).astype(jnp.float32)         # (C, N)
        nC = jnp.sum(RT, axis=1, keepdims=True)            # (C, 1) class counts

        gram = gram_ref[...]
        if kernel == 'rbf':
            # Exact f32 norms (wrapper) + accumulated Gram; reuse the big scratch for d2.
            d2 = jnp.maximum(sqc_ref[...] + sqr_ref[...] - 2.0 * gram, eps)   # (N, N)
            gram_ref[...] = d2
            # Group-independent per-class row sums of d2 (sigma_avg numerators), hoisted.
            rd = lax.dot_general(RT, gram_ref[...], (((1,), (0,)), ((), ())),
                                 preferred_element_type=jnp.float32)          # (C, N)
        else:   # 'poly': K = (x x^T)^2 on normalized features; group-independent
            gram_ref[...] = gram * gram
            kp = gram_ref[...].astype(k_mxu_dtype)
            rt_m = RT.astype(k_mxu_dtype)
            rkp = lax.dot_general(rt_m, kp, (((1,), (0,)), ((), ())),
                                  preferred_element_type=jnp.float32)          # (C, N)
            ss_num_p = jnp.sum(RT * rkp, axis=1, keepdims=True)                # (C, 1)

        def group_term(g):
            wgt = RT * (grp == g).astype(jnp.float32)       # (C, N) one-hot of (c, g)
            nCG = jnp.sum(wgt, axis=1, keepdims=True)       # (C, 1)

            if kernel == 'rbf':
                sig_num = jnp.sum(wgt * rd, axis=1, keepdims=True)             # (C, 1)
                sigma_avg = jnp.where(nCG > 0.0,
                                      sig_num / jnp.maximum(nC * nCG, 1.0), 1.0)
                scale_c = 1.0 / (2.0 * (sigma ** 2) * jnp.maximum(sigma_avg, eps))
                # Column j gets the scale of (label_j, g); padded cols -> 0 (unused).
                col_scale = jnp.sum(RT * scale_c, axis=0, keepdims=True)       # (1, N)
                arg = (-gram_ref[...] * col_scale).astype(exp_dtype)
                k_g = jnp.exp(arg).astype(k_mxu_dtype)      # ONE NxN exp per group
                # Fused indicator matmul [R | Wg]^T @ K (one MXU pass over K per group).
                rw = jnp.concatenate([RT, wgt], axis=0).astype(k_mxu_dtype)    # (2C, N)
                m = lax.dot_general(rw, k_g, (((1,), (0,)), ((), ())),
                                    preferred_element_type=jnp.float32)        # (2C, N)
                rk = m[:c_pad]
                wk = m[c_pad:]
                ss_num = jnp.sum(RT * rk, axis=1, keepdims=True)
                ssg_num = jnp.sum(wgt * rk, axis=1, keepdims=True)
                sgsg_num = jnp.sum(wgt * wk, axis=1, keepdims=True)
            else:
                wkp = lax.dot_general(wgt.astype(k_mxu_dtype), kp,
                                      (((1,), (0,)), ((), ())),
                                      preferred_element_type=jnp.float32)
                ss_num = ss_num_p
                ssg_num = jnp.sum(wgt * rkp, axis=1, keepdims=True)
                sgsg_num = jnp.sum(wgt * wkp, axis=1, keepdims=True)

            m_ss = ss_num / jnp.maximum(nC * nC, 1.0)
            m_ssg = ssg_num / jnp.maximum(nC * nCG, 1.0)
            m_sgsg = sgsg_num / jnp.maximum(nCG * nCG, 1.0)

            term = jnp.maximum(m_ss + m_sgsg - 2.0 * m_ssg, 0.0)
            term = jnp.where(nCG > 0.0, term, 0.0)          # skip empty (c, g) cells
            return jnp.sum(term, axis=0, keepdims=True)     # (1, 1)

        if num_groups <= 4:
            total = jnp.zeros((1, 1), jnp.float32)
            for g in range(num_groups):                     # unrolled: small trip count
                total = total + group_term(g)
        else:
            total = lax.fori_loop(0, num_groups,
                                  lambda g, acc: acc + group_term(g),
                                  jnp.zeros((1, 1), jnp.float32))

        out_ref[...] = (w_m * total / (2.0 * num_groups)).astype(jnp.float32)


def mmd_loss(f_s, groups, labels, *, w_m, sigma, num_groups, num_classes,
             kernel='rbf', gram_dtype=jnp.bfloat16, exp_dtype=jnp.float32):
    """Forward pass of MMDLoss.

    gram_dtype: MXU operand dtype for the Gram / epilogue kernel matmuls (bf16 default is
                the native fast path on v5e/v6e/v7x; use jnp.float32 for exact numerics).
    exp_dtype:  dtype of the RBF exp (set jnp.bfloat16 on v6e/v7x for bf16-EUP throughput;
                keep f32 on v5e which has no bf16 VPU/EUP).
    Note: labels must lie in [0, num_classes) and groups in [0, num_groups); the value -1
    is reserved for padding rows.
    """
    n = f_s.shape[0]
    x = f_s.reshape(n, -1).astype(jnp.float32)
    if kernel == 'poly':
        nrm = jnp.sqrt(jnp.sum(x * x, axis=1, keepdims=True))
        x = x / jnp.maximum(nrm, 1e-12)                    # F.normalize(x, dim=1)
    feat = x.shape[1]

    k_mxu_dtype = (jnp.bfloat16 if jnp.dtype(gram_dtype) == jnp.dtype(jnp.bfloat16)
                   else jnp.float32)
    itemsize = jnp.dtype(gram_dtype).itemsize

    n_pad = _round_up(max(n, 8), 128)                      # lane/MXU-aligned N x N tiles
    vmem_cap = _vmem_budget_bytes()

    # Streamed feature tile: as large as possible (amortizes the NxN accumulator RMW and
    # the ~0.35us/step pipeline overhead) while the double-buffered X tile fits in what
    # is left of the VMEM budget after the NxN scratch + epilogue temporaries.
    tile_budget = max(2 << 20, (vmem_cap - 3 * n_pad * n_pad * 4) // 3)
    tk_cap = max(128, min(2048, (tile_budget // (2 * n_pad * itemsize)) // 128 * 128))
    tk = int(min(tk_cap, _round_up(feat, 128)))
    f_pad = _round_up(feat, tk)

    # Exact f32 squared norms, computed once here (removes all per-step VPU work).
    sq = jnp.sum(x * x, axis=1)                                              # (n,)
    sq_col = jnp.zeros((n_pad, 1), jnp.float32).at[:n, 0].set(sq)
    sq_row = jnp.zeros((1, n_pad), jnp.float32).at[0, :n].set(sq)

    x_pad = jnp.zeros((n_pad, f_pad), jnp.float32).at[:n, :feat].set(x).astype(gram_dtype)
    lab_row = jnp.full((1, n_pad), -1, jnp.int32).at[0, :n].set(labels.astype(jnp.int32))
    grp_row = jnp.full((1, n_pad), -1, jnp.int32).at[0, :n].set(groups.astype(jnp.int32))

    # VMEM: gram/d2 scratch + ~2 live NxN f32 temporaries + bf16 k_g + pipelined X tiles.
    est = (3 * n_pad * n_pad * 4
           + n_pad * n_pad * jnp.dtype(k_mxu_dtype).itemsize
           + 3 * n_pad * tk * itemsize
           + (4 << 20))
    vmem_limit = int(min(max(est, 32 << 20), vmem_cap))

    c_pad = max(8, _round_up(num_classes, 8))
    flops = int(2 * n_pad * n_pad * f_pad
                + num_groups * (2 * (2 * c_pad) * n_pad * n_pad + 6 * n_pad * n_pad))
    transcendentals = int(num_groups * n_pad * n_pad) if kernel == 'rbf' else 0
    bytes_accessed = int(n_pad * f_pad * itemsize + 4 * n_pad * 4 + 4)

    kern = functools.partial(
        _mmd_kernel, w_m=float(w_m), sigma=float(sigma),
        num_groups=int(num_groups), num_classes=int(num_classes), kernel=kernel,
        exp_dtype=exp_dtype, k_mxu_dtype=k_mxu_dtype)

    out = pl.pallas_call(
        kern,
        out_shape=jax.ShapeDtypeStruct((1, 1), jnp.float32),
        grid=(f_pad // tk,),
        in_specs=[
            pl.BlockSpec((n_pad, tk), lambda k: (0, k)),   # streamed feature tiles
            pl.BlockSpec((n_pad, 1), lambda k: (0, 0)),    # ||x_i||^2 (column layout)
            pl.BlockSpec((1, n_pad), lambda k: (0, 0)),    # ||x_j||^2 (lane-dense row)
            pl.BlockSpec((1, n_pad), lambda k: (0, 0)),    # labels (lane-dense, resident)
            pl.BlockSpec((1, n_pad), lambda k: (0, 0)),    # groups (lane-dense, resident)
        ],
        out_specs=pl.BlockSpec((1, 1), lambda k: (0, 0)),
        scratch_shapes=[
            pltpu.VMEM((n_pad, n_pad), jnp.float32),       # Gram accumulator (reused for d2)
        ],
        compiler_params=pltpu.CompilerParams(
            dimension_semantics=("arbitrary",),            # F axis is a reduction
            vmem_limit_bytes=vmem_limit),
        cost_estimate=pl.CostEstimate(
            flops=flops, transcendentals=transcendentals, bytes_accessed=bytes_accessed),
    )(x_pad, sq_col, sq_row, lab_row, grp_row)
    return out[0, 0]


def _ref_mmd(f_s, groups, labels, *, w_m, sigma, num_groups, num_classes, kernel='rbf'):
    """Pure numpy reference mirroring the PyTorch forward (dynamic boolean indexing)."""
    student = np.asarray(f_s, dtype=np.float64).reshape(f_s.shape[0], -1)
    if kernel == 'poly':
        nrm = np.maximum(np.linalg.norm(student, axis=1, keepdims=True), 1e-12)
        student = student / nrm
    labels = np.asarray(labels)
    groups = np.asarray(groups)

    def pdist(e1, e2, sigma_avg=None):
        if len(e1) == 0 or len(e2) == 0:
            return np.zeros(1), sigma_avg
        if kernel == 'rbf':
            e1s = (e1 ** 2).sum(1)
            e2s = (e2 ** 2).sum(1)
            res = np.clip(e1s[:, None] + e2s[None, :] - 2.0 * (e1 @ e2.T), 1e-12, None)
            if sigma_avg is None:
                sigma_avg = res.mean()
            res = np.exp(-res / (2.0 * sigma ** 2 * sigma_avg))
        else:
            res = (e1 @ e2.T) ** 2
        return res, sigma_avg

    mmd = 0.0
    for c in range(num_classes):
        tj = student[labels == c]
        for g in range(num_groups):
            sg = student[(labels == c) & (groups == g)]
            if len(sg) == 0:
                continue
            k_ssg, sa = pdist(tj, sg)
            k_sgsg, _ = pdist(sg, sg, sa)
            k_ss, _ = pdist(tj, tj, sa)
            mmd += max(k_ss.mean() + k_sgsg.mean() - 2.0 * k_ssg.mean(), 0.0)
    return w_m * mmd / (2.0 * num_groups)


if __name__ == "__main__":
    # Deterministic synthetic inputs (small shapes consistent with the module).
    B, C, H, W = 16, 4, 8, 8
    num_classes, num_groups = 2, 2
    w_m, sigma = 1.0, 1.0

    key = jax.random.PRNGKey(0)
    kx, kl, kg = jax.random.split(key, 3)
    f_s = jax.random.normal(kx, (B, C, H, W), jnp.float32)
    labels = jax.random.randint(kl, (B,), 0, num_classes, jnp.int32)
    groups = jax.random.randint(kg, (B,), 0, num_groups, jnp.int32)

    f_np, l_np, g_np = np.array(f_s), np.array(labels), np.array(groups)
    ref_rbf = _ref_mmd(f_np, g_np, l_np, w_m=w_m, sigma=sigma, num_groups=num_groups,
                       num_classes=num_classes, kernel='rbf')
    ref_poly = _ref_mmd(f_np, g_np, l_np, w_m=w_m, sigma=sigma, num_groups=num_groups,
                        num_classes=num_classes, kernel='poly')

    # 1) RBF, f32 Gram operands (tight check against the PyTorch-equivalent reference).
    out_rbf_f32 = jax.block_until_ready(
        mmd_loss(f_s, groups, labels, w_m=w_m, sigma=sigma, num_groups=num_groups,
                 num_classes=num_classes, kernel='rbf', gram_dtype=jnp.float32))
    assert np.isclose(float(out_rbf_f32), float(ref_rbf), rtol=5e-3, atol=1e-5), \
        (float(out_rbf_f32), float(ref_rbf))

    # 2) RBF, default bf16 MXU operands (fast path on v5e/v6e/v7x); looser tolerance.
    out_rbf_bf16 = jax.block_until_ready(
        mmd_loss(f_s, groups, labels, w_m=w_m, sigma=sigma, num_groups=num_groups,
                 num_classes=num_classes, kernel='rbf'))
    assert np.isclose(float(out_rbf_bf16), float(ref_rbf), rtol=5e-2, atol=1e-3), \
        (float(out_rbf_bf16), float(ref_rbf))

    # 3) Poly kernel path, default bf16 MXU operands.
    out_poly = jax.block_until_ready(
        mmd_loss(f_s, groups, labels, w_m=w_m, sigma=sigma, num_groups=num_groups,
                 num_classes=num_classes, kernel='poly'))
    assert np.isclose(float(out_poly), float(ref_poly), rtol=5e-2, atol=1e-3), \
        (float(out_poly), float(ref_poly))

    print("KERNEL_OK")
</pallas_src>

<mosaic_0001>
module attributes {stable_mosaic.version = 11 : i64} {
  func.func @_mmd_kernel(%arg0: i32, %arg1: memref<128x256xf32, #tpu.memory_space<vmem>>, %arg2: memref<128x1xf32, #tpu.memory_space<vmem>>, %arg3: memref<1x128xf32, #tpu.memory_space<vmem>>, %arg4: memref<1x128xi32, #tpu.memory_space<vmem>>, %arg5: memref<1x128xi32, #tpu.memory_space<vmem>>, %arg6: memref<1x1xf32, #tpu.memory_space<vmem>>, %arg7: memref<128x128xf32, #tpu.memory_space<vmem>>) attributes {dimension_semantics = [#tpu.dimension_semantics<arbitrary>], iteration_bounds = array<i64: 1>, scalar_prefetch = 0 : i64, scratch_operands = 1 : i64, tpu.core_type = #tpu.core_type<tc>, window_params = [{transform_indices = @transform_0, window_bounds = array<i64: 128, 256>}, {pipeline_mode = #tpu.pipeline_mode<synchronous>, transform_indices = @transform_1, window_bounds = array<i64: 128, 1>}, {pipeline_mode = #tpu.pipeline_mode<synchronous>, transform_indices = @transform_2, window_bounds = array<i64: 1, 128>}, {pipeline_mode = #tpu.pipeline_mode<synchronous>, transform_indices = @transform_3, window_bounds = array<i64: 1, 128>}, {pipeline_mode = #tpu.pipeline_mode<synchronous>, transform_indices = @transform_4, window_bounds = array<i64: 1, 128>}, {pipeline_mode = #tpu.pipeline_mode<synchronous>, transform_indices = @transform_5, window_bounds = array<i64: 1, 1>}]} {
    %c0_i32 = arith.constant 0 : i32
    %0 = arith.cmpi eq, %arg0, %c0_i32 : i32
    %1 = arith.extui %0 : i1 to i32
    %c0_i32_0 = arith.constant 0 : i32
    %2 = arith.cmpi ne, %1, %c0_i32_0 : i32
    scf.if %2 {
      %cst_8 = arith.constant 0.000000e+00 : f32
      %11 = vector.broadcast %cst_8 : f32 to vector<128x128xf32>
      %c0_9 = arith.constant 0 : index
      %c0_10 = arith.constant 0 : index
      %12 = vector.load %arg7[%c0_9, %c0_10] : memref<128x128xf32, #tpu.memory_space<vmem>>, vector<128x128xf32>
      tpu.vector_store %arg7[%c0_9, %c0_10], %11 {strides = array<i32>} : memref<128x128xf32, #tpu.memory_space<vmem>>, vector<128x128xf32>,
    } else {
    }
    %c0 = arith.constant 0 : index
    %c0_1 = arith.constant 0 : index
    %3 = vector.load %arg1[%c0, %c0_1] : memref<128x256xf32, #tpu.memory_space<vmem>>, vector<128x256xf32>
    %c0_2 = arith.constant 0 : index
    %c0_3 = arith.constant 0 : index
    %4 = vector.load %arg7[%c0_2, %c0_3] : memref<128x128xf32, #tpu.memory_space<vmem>>, vector<128x128xf32>
    %cst = arith.constant dense<0.000000e+00> : vector<128x128xf32>
    %5 = tpu.matmul %3, %3, %cst {dimension_numbers = #tpu.dot_dimension_numbers<[1], [1], [0], [0], [0, 0, 1, 0], [], []>} : vector<128x256xf32>, vector<128x256xf32>, vector<128x128xf32> -> vector<128x128xf32>
    %6 = arith.addf %4, %5 : vector<128x128xf32>
    %c0_4 = arith.constant 0 : index
    %c0_5 = arith.constant 0 : index
    %7 = vector.load %arg7[%c0_4, %c0_5] : memref<128x128xf32, #tpu.memory_space<vmem>>, vector<128x128xf32>
    tpu.vector_store %arg7[%c0_4, %c0_5], %6 {strides = array<i32>} : memref<128x128xf32, #tpu.memory_space<vmem>>, vector<128x128xf32>,
    %c0_i32_6 = arith.constant 0 : i32
    %8 = arith.cmpi eq, %arg0, %c0_i32_6 : i32
    %9 = arith.extui %8 : i1 to i32
    %c0_i32_7 = arith.constant 0 : i32
    %10 = arith.cmpi ne, %9, %c0_i32_7 : i32
    scf.if %10 {
      %c0_8 = arith.constant 0 : index
      %c0_9 = arith.constant 0 : index
      %11 = vector.load %arg4[%c0_8, %c0_9] : memref<1x128xi32, #tpu.memory_space<vmem>>, vector<1x128xi32>
      %c0_10 = arith.constant 0 : index
      %c0_11 = arith.constant 0 : index
      %12 = vector.load %arg5[%c0_10, %c0_11] : memref<1x128xi32, #tpu.memory_space<vmem>>, vector<1x128xi32>
      %13 = tpu.iota {dimensions = array<i32: 0>} : vector<8x128xi32>
      %14 = vector.broadcast %11 : vector<1x128xi32> to vector<8x128xi32>
      %15 = arith.cmpi eq, %13, %14 : vector<8x128xi32>
      %16 = arith.extui %15 : vector<8x128xi1> to vector<8x128xi32>
      %17 = arith.sitofp %16 : vector<8x128xi32> to vector<8x128xf32>
      %cst_12 = arith.constant dense<0.000000e+00> : vector<8xf32>
      %18 = vector.multi_reduction <add>, %17, %cst_12 [1] : vector<8x128xf32> to vector<8xf32>
      %19 = vector.shape_cast %18 : vector<8xf32> to vector<8x1xf32>
      %c0_13 = arith.constant 0 : index
      %c0_14 = arith.constant 0 : index
      %20 = vector.load %arg7[%c0_13, %c0_14] : memref<128x128xf32, #tpu.memory_space<vmem>>, vector<128x128xf32>
      %c0_15 = arith.constant 0 : index
      %c0_16 = arith.constant 0 : index
      %21 = vector.load %arg2[%c0_15, %c0_16] : memref<128x1xf32, #tpu.memory_space<vmem>>, vector<128x1xf32>
      %c0_17 = arith.constant 0 : index
      %c0_18 = arith.constant 0 : index
      %22 = vector.load %arg3[%c0_17, %c0_18] : memref<1x128xf32, #tpu.memory_space<vmem>>, vector<1x128xf32>
      %23 = vector.broadcast %21 : vector<128x1xf32> to vector<128x128xf32>
      %24 = vector.broadcast %22 : vector<1x128xf32> to vector<128x128xf32>
      %25 = arith.addf %23, %24 : vector<128x128xf32>
      %cst_19 = arith.constant 2.000000e+00 : f32
      %26 = vector.broadcast %cst_19 : f32 to vector<128x128xf32>
      %27 = arith.mulf %26, %20 : vector<128x128xf32>
      %28 = arith.subf %25, %27 : vector<128x128xf32>
      %cst_20 = arith.constant 9.99999996E-13 : f32
      %29 = vector.broadcast %cst_20 : f32 to vector<128x128xf32>
      %30 = arith.maximumf %28, %29 : vector<128x128xf32>
      %c0_21 = arith.constant 0 : index
      %c0_22 = arith.constant 0 : index
      %31 = vector.load %arg7[%c0_21, %c0_22] : memref<128x128xf32, #tpu.memory_space<vmem>>, vector<128x128xf32>
      tpu.vector_store %arg7[%c0_21, %c0_22], %30 {strides = array<i32>} : memref<128x128xf32, #tpu.memory_space<vmem>>, vector<128x128xf32>,
      %c0_23 = arith.constant 0 : index
      %c0_24 = arith.constant 0 : index
      %32 = vector.load %arg7[%c0_23, %c0_24] : memref<128x128xf32, #tpu.memory_space<vmem>>, vector<128x128xf32>
      %cst_25 = arith.constant dense<0.000000e+00> : vector<8x128xf32>
      %33 = tpu.matmul %17, %32, %cst_25 {dimension_numbers = #tpu.dot_dimension_numbers<[1], [0], [0], [1], [0, 0, 1, 1], [], []>} : vector<8x128xf32>, vector<128x128xf32>, vector<8x128xf32> -> vector<8x128xf32>
      %cst_26 = arith.constant 0.000000e+00 : f32
      %34 = vector.broadcast %cst_26 : f32 to vector<1x1xf32>
      %c0_i32_27 = arith.constant 0 : i32
      %35 = vector.broadcast %c0_i32_27 : i32 to vector<1x128xi32>
      %36 = arith.cmpi eq, %12, %35 : vector<1x128xi32>
      %37 = arith.extui %36 : vector<1x128xi1> to vector<1x128xi32>
      %38 = arith.sitofp %37 : vector<1x128xi32> to vector<1x128xf32>
      %39 = vector.broadcast %38 : vector<1x128xf32> to vector<8x128xf32>
      %40 = arith.mulf %17, %39 : vector<8x128xf32>
      %cst_28 = arith.constant dense<0.000000e+00> : vector<8xf32>
      %41 = vector.multi_reduction <add>, %40, %cst_28 [1] : vector<8x128xf32> to vector<8xf32>
      %42 = vector.shape_cast %41 : vector<8xf32> to vector<8x1xf32>
      %43 = arith.mulf %40, %33 : vector<8x128xf32>
      %cst_29 = arith.constant dense<0.000000e+00> : vector<8xf32>
      %44 = vector.multi_reduction <add>, %43, %cst_29 [1] : vector<8x128xf32> to vector<8xf32>
      %45 = vector.shape_cast %44 : vector<8xf32> to vector<8x1xf32>
      %cst_30 = arith.constant 0.000000e+00 : f32
      %46 = vector.broadcast %cst_30 : f32 to vector<8x1xf32>
      %47 = arith.cmpf ogt, %42, %46 : vector<8x1xf32>
      %48 = arith.mulf %19, %42 : vector<8x1xf32>
      %cst_31 = arith.constant 1.000000e+00 : f32
      %49 = vector.broadcast %cst_31 : f32 to vector<8x1xf32>
      %50 = arith.maximumf %48, %49 : vector<8x1xf32>
      %51 = arith.divf %45, %50 : vector<8x1xf32>
      %cst_32 = arith.constant 1.000000e+00 : f32
      %52 = vector.broadcast %cst_32 : f32 to vector<8x1xf32>
      %53 = arith.select %47, %51, %52 : vector<8x1xi1>, vector<8x1xf32>
      %cst_33 = arith.constant 9.99999996E-13 : f32
      %54 = vector.broadcast %cst_33 : f32 to vector<8x1xf32>
      %55 = arith.maximumf %53, %54 : vector<8x1xf32>
      %cst_34 = arith.constant 2.000000e+00 : f32
      %56 = vector.broadcast %cst_34 : f32 to vector<8x1xf32>
      %57 = arith.mulf %56, %55 : vector<8x1xf32>
      %cst_35 = arith.constant 1.000000e+00 : f32
      %58 = vector.broadcast %cst_35 : f32 to vector<8x1xf32>
      %59 = arith.divf %58, %57 : vector<8x1xf32>
      %60 = vector.broadcast %59 : vector<8x1xf32> to vector<8x128xf32>
      %61 = arith.mulf %17, %60 : vector<8x128xf32>
      %cst_36 = arith.constant dense<0.000000e+00> : vector<128xf32>
      %62 = vector.multi_reduction <add>, %61, %cst_36 [0] : vector<8x128xf32> to vector<128xf32>
      %63 = vector.shape_cast %62 : vector<128xf32> to vector<1x128xf32>
      %c0_37 = arith.constant 0 : index
      %c0_38 = arith.constant 0 : index
      %64 = vector.load %arg7[%c0_37, %c0_38] : memref<128x128xf32, #tpu.memory_space<vmem>>, vector<128x128xf32>
      %cst_39 = arith.constant 0.000000e+00 : f32
      %65 = vector.broadcast %cst_39 : f32 to vector<128x128xf32>
      %66 = arith.subf %65, %64 : vector<128x128xf32>
      %67 = vector.broadcast %63 : vector<1x128xf32> to vector<128x128xf32>
      %68 = arith.mulf %66, %67 : vector<128x128xf32>
      %69 = math.exp %68 : vector<128x128xf32>
      %70 = tpu.concatenate %17, %40 in 0 : vector<8x128xf32>, vector<8x128xf32> -> vector<16x128xf32>
      %cst_40 = arith.constant dense<0.000000e+00> : vector<16x128xf32>
      %71 = tpu.matmul %70, %69, %cst_40 {dimension_numbers = #tpu.dot_dimension_numbers<[1], [0], [0], [1], [0, 0, 1, 1], [], []>} : vector<16x128xf32>, vector<128x128xf32>, vector<16x128xf32> -> vector<16x128xf32>
      %72 = vector.extract_strided_slice %71 {offsets = [0, 0], sizes = [8, 128], strides = [1, 1]} : vector<16x128xf32> to vector<8x128xf32>
      %73 = vector.extract_strided_slice %71 {offsets = [8, 0], sizes = [8, 128], strides = [1, 1]} : vector<16x128xf32> to vector<8x128xf32>
      %74 = arith.mulf %17, %72 : vector<8x128xf32>
      %cst_41 = arith.constant dense<0.000000e+00> : vector<8xf32>
      %75 = vector.multi_reduction <add>, %74, %cst_41 [1] : vector<8x128xf32> to vector<8xf32>
      %76 = vector.shape_cast %75 : vector<8xf32> to vector<8x1xf32>
      %77 = arith.mulf %40, %72 : vector<8x128xf32>
      %cst_42 = arith.constant dense<0.000000e+00> : vector<8xf32>
      %78 = vector.multi_reduction <add>, %77, %cst_42 [1] : vector<8x128xf32> to vector<8xf32>
      %79 = vector.shape_cast %78 : vector<8xf32> to vector<8x1xf32>
      %80 = arith.mulf %40, %73 : vector<8x128xf32>
      %cst_43 = arith.constant dense<0.000000e+00> : vector<8xf32>
      %81 = vector.multi_reduction <add>, %80, %cst_43 [1] : vector<8x128xf32> to vector<8xf32>
      %82 = vector.shape_cast %81 : vector<8xf32> to vector<8x1xf32>
      %83 = arith.mulf %19, %19 : vector<8x1xf32>
      %cst_44 = arith.constant 1.000000e+00 : f32
      %84 = vector.broadcast %cst_44 : f32 to vector<8x1xf32>
      %85 = arith.maximumf %83, %84 : vector<8x1xf32>
      %86 = arith.divf %76, %85 : vector<8x1xf32>
      %87 = arith.mulf %19, %42 : vector<8x1xf32>
      %cst_45 = arith.constant 1.000000e+00 : f32
      %88 = vector.broadcast %cst_45 : f32 to vector<8x1xf32>
      %89 = arith.maximumf %87, %88 : vector<8x1xf32>
      %90 = arith.divf %79, %89 : vector<8x1xf32>
      %91 = arith.mulf %42, %42 : vector<8x1xf32>
      %cst_46 = arith.constant 1.000000e+00 : f32
      %92 = vector.broadcast %cst_46 : f32 to vector<8x1xf32>
      %93 = arith.maximumf %91, %92 : vector<8x1xf32>
      %94 = arith.divf %82, %93 : vector<8x1xf32>
      %95 = arith.addf %86, %94 : vector<8x1xf32>
      %cst_47 = arith.constant 2.000000e+00 : f32
      %96 = vector.broadcast %cst_47 : f32 to vector<8x1xf32>
      %97 = arith.mulf %96, %90 : vector<8x1xf32>
      %98 = arith.subf %95, %97 : vector<8x1xf32>
      %cst_48 = arith.constant 0.000000e+00 : f32
      %99 = vector.broadcast %cst_48 : f32 to vector<8x1xf32>
      %100 = arith.maximumf %98, %99 : vector<8x1xf32>
      %cst_49 = arith.constant 0.000000e+00 : f32
      %101 = vector.broadcast %cst_49 : f32 to vector<8x1xf32>
      %102 = arith.cmpf ogt, %42, %101 : vector<8x1xf32>
      %cst_50 = arith.constant 0.000000e+00 : f32
      %103 = vector.broadcast %cst_50 : f32 to vector<8x1xf32>
      %104 = arith.select %102, %100, %103 : vector<8x1xi1>, vector<8x1xf32>
      %cst_51 = arith.constant dense<0.000000e+00> : vector<1xf32>
      %105 = vector.multi_reduction <add>, %104, %cst_51 [0] : vector<8x1xf32> to vector<1xf32>
      %106 = vector.shape_cast %105 : vector<1xf32> to vector<1x1xf32>
      %107 = arith.addf %34, %106 : vector<1x1xf32>
      %c1_i32 = arith.constant 1 : i32
      %108 = vector.broadcast %c1_i32 : i32 to vector<1x128xi32>
      %109 = arith.cmpi eq, %12, %108 : vector<1x128xi32>
      %110 = arith.extui %109 : vector<1x128xi1> to vector<1x128xi32>
      %111 = arith.sitofp %110 : vector<1x128xi32> to vector<1x128xf32>
      %112 = vector.broadcast %111 : vector<1x128xf32> to vector<8x128xf32>
      %113 = arith.mulf %17, %112 : vector<8x128xf32>
      %cst_52 = arith.constant dense<0.000000e+00> : vector<8xf32>
      %114 = vector.multi_reduction <add>, %113, %cst_52 [1] : vector<8x128xf32> to vector<8xf32>
      %115 = vector.shape_cast %114 : vector<8xf32> to vector<8x1xf32>
      %116 = arith.mulf %113, %33 : vector<8x128xf32>
      %cst_53 = arith.constant dense<0.000000e+00> : vector<8xf32>
      %117 = vector.multi_reduction <add>, %116, %cst_53 [1] : vector<8x128xf32> to vector<8xf32>
      %118 = vector.shape_cast %117 : vector<8xf32> to vector<8x1xf32>
      %cst_54 = arith.constant 0.000000e+00 : f32
      %119 = vector.broadcast %cst_54 : f32 to vector<8x1xf32>
      %120 = arith.cmpf ogt, %115, %119 : vector<8x1xf32>
      %121 = arith.mulf %19, %115 : vector<8x1xf32>
      %cst_55 = arith.constant 1.000000e+00 : f32
      %122 = vector.broadcast %cst_55 : f32 to vector<8x1xf32>
      %123 = arith.maximumf %121, %122 : vector<8x1xf32>
      %124 = arith.divf %118, %123 : vector<8x1xf32>
      %cst_56 = arith.constant 1.000000e+00 : f32
      %125 = vector.broadcast %cst_56 : f32 to vector<8x1xf32>
      %126 = arith.select %120, %124, %125 : vector<8x1xi1>, vector<8x1xf32>
      %cst_57 = arith.constant 9.99999996E-13 : f32
      %127 = vector.broadcast %cst_57 : f32 to vector<8x1xf32>
      %128 = arith.maximumf %126, %127 : vector<8x1xf32>
      %cst_58 = arith.constant 2.000000e+00 : f32
      %129 = vector.broadcast %cst_58 : f32 to vector<8x1xf32>
      %130 = arith.mulf %129, %128 : vector<8x1xf32>
      %cst_59 = arith.constant 1.000000e+00 : f32
      %131 = vector.broadcast %cst_59 : f32 to vector<8x1xf32>
      %132 = arith.divf %131, %130 : vector<8x1xf32>
      %133 = vector.broadcast %132 : vector<8x1xf32> to vector<8x128xf32>
      %134 = arith.mulf %17, %133 : vector<8x128xf32>
      %cst_60 = arith.constant dense<0.000000e+00> : vector<128xf32>
      %135 = vector.multi_reduction <add>, %134, %cst_60 [0] : vector<8x128xf32> to vector<128xf32>
      %136 = vector.shape_cast %135 : vector<128xf32> to vector<1x128xf32>
      %c0_61 = arith.constant 0 : index
      %c0_62 = arith.constant 0 : index
      %137 = vector.load %arg7[%c0_61, %c0_62] : memref<128x128xf32, #tpu.memory_space<vmem>>, vector<128x128xf32>
      %cst_63 = arith.constant 0.000000e+00 : f32
      %138 = vector.broadcast %cst_63 : f32 to vector<128x128xf32>
      %139 = arith.subf %138, %137 : vector<128x128xf32>
      %140 = vector.broadcast %136 : vector<1x128xf32> to vector<128x128xf32>
      %141 = arith.mulf %139, %140 : vector<128x128xf32>
      %142 = math.exp %141 : vector<128x128xf32>
      %143 = tpu.concatenate %17, %113 in 0 : vector<8x128xf32>, vector<8x128xf32> -> vector<16x128xf32>
      %cst_64 = arith.constant dense<0.000000e+00> : vector<16x128xf32>
      %144 = tpu.matmul %143, %142, %cst_64 {dimension_numbers = #tpu.dot_dimension_numbers<[1], [0], [0], [1], [0, 0, 1, 1], [], []>} : vector<16x128xf32>, vector<128x128xf32>, vector<16x128xf32> -> vector<16x128xf32>
      %145 = vector.extract_strided_slice %144 {offsets = [0, 0], sizes = [8, 128], strides = [1, 1]} : vector<16x128xf32> to vector<8x128xf32>
      %146 = vector.extract_strided_slice %144 {offsets = [8, 0], sizes = [8, 128], strides = [1, 1]} : vector<16x128xf32> to vector<8x128xf32>
      %147 = arith.mulf %17, %145 : vector<8x128xf32>
      %cst_65 = arith.constant dense<0.000000e+00> : vector<8xf32>
      %148 = vector.multi_reduction <add>, %147, %cst_65 [1] : vector<8x128xf32> to vector<8xf32>
      %149 = vector.shape_cast %148 : vector<8xf32> to vector<8x1xf32>
      %150 = arith.mulf %113, %145 : vector<8x128xf32>
      %cst_66 = arith.constant dense<0.000000e+00> : vector<8xf32>
      %151 = vector.multi_reduction <add>, %150, %cst_66 [1] : vector<8x128xf32> to vector<8xf32>
      %152 = vector.shape_cast %151 : vector<8xf32> to vector<8x1xf32>
      %153 = arith.mulf %113, %146 : vector<8x128xf32>
      %cst_67 = arith.constant dense<0.000000e+00> : vector<8xf32>
      %154 = vector.multi_reduction <add>, %153, %cst_67 [1] : vector<8x128xf32> to vector<8xf32>
      %155 = vector.shape_cast %154 : vector<8xf32> to vector<8x1xf32>
      %156 = arith.mulf %19, %19 : vector<8x1xf32>
      %cst_68 = arith.constant 1.000000e+00 : f32
      %157 = vector.broadcast %cst_68 : f32 to vector<8x1xf32>
      %158 = arith.maximumf %156, %157 : vector<8x1xf32>
      %159 = arith.divf %149, %158 : vector<8x1xf32>
      %160 = arith.mulf %19, %115 : vector<8x1xf32>
      %cst_69 = arith.constant 1.000000e+00 : f32
      %161 = vector.broadcast %cst_69 : f32 to vector<8x1xf32>
      %162 = arith.maximumf %160, %161 : vector<8x1xf32>
      %163 = arith.divf %152, %162 : vector<8x1xf32>
      %164 = arith.mulf %115, %115 : vector<8x1xf32>
      %cst_70 = arith.constant 1.000000e+00 : f32
      %165 = vector.broadcast %cst_70 : f32 to vector<8x1xf32>
      %166 = arith.maximumf %164, %165 : vector<8x1xf32>
      %167 = arith.divf %155, %166 : vector<8x1xf32>
      %168 = arith.addf %159, %167 : vector<8x1xf32>
      %cst_71 = arith.constant 2.000000e+00 : f32
      %169 = vector.broadcast %cst_71 : f32 to vector<8x1xf32>
      %170 = arith.mulf %169, %163 : vector<8x1xf32>
      %171 = arith.subf %168, %170 : vector<8x1xf32>
      %cst_72 = arith.constant 0.000000e+00 : f32
      %172 = vector.broadcast %cst_72 : f32 to vector<8x1xf32>
      %173 = arith.maximumf %171, %172 : vector<8x1xf32>
      %cst_73 = arith.constant 0.000000e+00 : f32
      %174 = vector.broadcast %cst_73 : f32 to vector<8x1xf32>
      %175 = arith.cmpf ogt, %115, %174 : vector<8x1xf32>
      %cst_74 = arith.constant 0.000000e+00 : f32
      %176 = vector.broadcast %cst_74 : f32 to vector<8x1xf32>
      %177 = arith.select %175, %173, %176 : vector<8x1xi1>, vector<8x1xf32>
      %cst_75 = arith.constant dense<0.000000e+00> : vector<1xf32>
      %178 = vector.multi_reduction <add>, %177, %cst_75 [0] : vector<8x1xf32> to vector<1xf32>
      %179 = vector.shape_cast %178 : vector<1xf32> to vector<1x1xf32>
      %180 = arith.addf %107, %179 : vector<1x1xf32>
      %cst_76 = arith.constant 1.000000e+00 : f32
      %181 = vector.broadcast %cst_76 : f32 to vector<1x1xf32>
      %182 = arith.mulf %181, %180 : vector<1x1xf32>
      %cst_77 = arith.constant 4.000000e+00 : f32
      %183 = vector.broadcast %cst_77 : f32 to vector<1x1xf32>
      %184 = arith.divf %182, %183 : vector<1x1xf32>
      %c0_78 = arith.constant 0 : index
      %c0_79 = arith.constant 0 : index
      %185 = vector.load %arg6[%c0_78, %c0_79] : memref<1x1xf32, #tpu.memory_space<vmem>>, vector<1x1xf32>
      tpu.vector_store %arg6[%c0_78, %c0_79], %184 {strides = array<i32>} : memref<1x1xf32, #tpu.memory_space<vmem>>, vector<1x1xf32>,
    } else {
    }
    return
  }
  func.func @transform_0(%arg0: i32) -> (i32, i32) {
    %c0_i32 = arith.constant 0 : i32
    %c0_i32_0 = arith.constant 0 : i32
    return %c0_i32, %arg0 : i32, i32
  }
  func.func @transform_1(%arg0: i32) -> (i32, i32) {
    %c0_i32 = arith.constant 0 : i32
    %c0_i32_0 = arith.constant 0 : i32
    %c0_i32_1 = arith.constant 0 : i32
    return %c0_i32, %c0_i32_0 : i32, i32
  }
  func.func @transform_2(%arg0: i32) -> (i32, i32) {
    %c0_i32 = arith.constant 0 : i32
    %c0_i32_0 = arith.constant 0 : i32
    %c0_i32_1 = arith.constant 0 : i32
    return %c0_i32, %c0_i32_0 : i32, i32
  }
  func.func @transform_3(%arg0: i32) -> (i32, i32) {
    %c0_i32 = arith.constant 0 : i32
    %c0_i32_0 = arith.constant 0 : i32
    %c0_i32_1 = arith.constant 0 : i32
    return %c0_i32, %c0_i32_0 : i32, i32
  }
  func.func @transform_4(%arg0: i32) -> (i32, i32) {
    %c0_i32 = arith.constant 0 : i32
    %c0_i32_0 = arith.constant 0 : i32
    %c0_i32_1 = arith.constant 0 : i32
    return %c0_i32, %c0_i32_0 : i32, i32
  }
  func.func @transform_5(%arg0: i32) -> (i32, i32) {
    %c0_i32 = arith.constant 0 : i32
    %c0_i32_0 = arith.constant 0 : i32
    %c0_i32_1 = arith.constant 0 : i32
    return %c0_i32, %c0_i32_0 : i32, i32
  }
}

</mosaic_0001>

<llo_original>
// kernel: tpu_custom_call.1
$region0: #{tpu_custom_call.1}
  #allocation0 [shape = 'u32[]', space=smem, size = 0x4, offset = 0x4, fixed_abs, tag = 'smem constant byte address 0x4 - core index']
  #allocation1 [shape = 'u32[144,128]{1,0:T(1,128)}', space=vmem, size = 0x12000, scoped, tag = 'internal scratch']
  #allocation2 [shape = 'f32[128,128]{1,0:T(8,128)}', space=vmem, size = 0x10000, scoped, tag = 'scratch operand']
  %s0 = inlined_call_operand.hbm [shape: f32[128,256], index: 0, kind: input, shape index: {}]
  %s1 = inlined_call_operand.vmem [shape: f32[128,1], index: 1, kind: input, shape index: {}]
  %s2 = inlined_call_operand.vmem [shape: f32[1,128], index: 2, kind: input, shape index: {}]
  %s3 = inlined_call_operand.vmem [shape: s32[1,128], index: 3, kind: input, shape index: {}]
  %s4 = inlined_call_operand.vmem [shape: s32[1,128], index: 4, kind: input, shape index: {}]
  %s5 = inlined_call_operand.hbm [shape: f32[1,1], index: 5, kind: output, shape index: {}]
  %s6 = sld [smem:[#allocation0]]
  $region42: #{tpu_custom_call.1} parent=0
    _
  %s8 = ssub.s32 1, %s6
  %s9 = scalar_select 0, %s8, %s6
  $region1: #{tpu_custom_call.1} parent=0
    #allocation3 [shape = 'u8[131072]{0}', space=vmem, size = 0x20000, scoped, tag = 'input window, operand 0, single buffered']
    #allocation4 [shape = 's32[1]{0}', space=sflag, size = 0x4, scoped, tag = 'scoped memory for tpu_custom_call.1']
    #allocation5 [shape = 's32[1]{0}', space=sflag, size = 0x4, scoped, tag = 'scoped memory for tpu_custom_call.1']
    #allocation6 [shape = 'u8[512]{0}', space=vmem, size = 0x400, scoped, tag = 'output window, operand 0, single buffered']
    %10 = vsyncpa [#allocation4], 0
    %11 = vsyncpa [#allocation5], 0
    // Predicated region
    $region2: #{tpu_custom_call.1} parent=1 // pred_check
      _
    $region3: #{tpu_custom_call.1} parent=1 // pred_check_branch
      %13 = sbr.rel (0) target = $region5
    $region4: #{tpu_custom_call.1} parent=1 // pred_region
      %s15 = ssub.s32 4096, 4096
      %16 = vsyncadd [#allocation4], %s15
      %s17 = sshll.u32 [#allocation3], 4
      %s18 = int_to_ptr.vmem [resolvable:$true] %s17
      %23 = dma.hbm_to_vmem [thread:$0]  %s0, 4096, %s18, [#allocation4], 256, 256, 16
    $region5: #{tpu_custom_call.1} parent=1 // pred_fallthru
      _
    // Predicated region
    $region6: #{tpu_custom_call.1} parent=1 // pred_check
      _
    $region7: #{tpu_custom_call.1} parent=1 // pred_check_branch
      %25 = sbr.rel (0) target = $region9
    $region8: #{tpu_custom_call.1} parent=1 // pred_region
      _
    $region9: #{tpu_custom_call.1} parent=1 // pred_fallthru
      _
    // Predicated region
    $region10: #{tpu_custom_call.1} parent=1 // pred_check
      _
    $region11: #{tpu_custom_call.1} parent=1 // pred_check_branch
      %27 = sbr.rel (0) target = $region13
    $region12: #{tpu_custom_call.1} parent=1 // pred_region
      _
    $region13: #{tpu_custom_call.1} parent=1 // pred_fallthru
      _
    // Predicated region
    $region14: #{tpu_custom_call.1} parent=1 // pred_check
      _
    $region15: #{tpu_custom_call.1} parent=1 // pred_check_branch
      %29 = sbr.rel (0) target = $region17
    $region16: #{tpu_custom_call.1} parent=1 // pred_region
      _
    $region17: #{tpu_custom_call.1} parent=1 // pred_fallthru
      _
    // Predicated region
    $region18: #{tpu_custom_call.1} parent=1 // pred_check
      _
    $region19: #{tpu_custom_call.1} parent=1 // pred_check_branch
      %31 = sbr.rel (0) target = $region21
    $region20: #{tpu_custom_call.1} parent=1 // pred_region
      _
    $region21: #{tpu_custom_call.1} parent=1 // pred_fallthru
      _
    // Predicated region
    $region22: #{tpu_custom_call.1} parent=1 // pred_check
      _
    $region23: #{tpu_custom_call.1} parent=1 // pred_check_branch
      %33 = sbr.rel (0) target = $region25
    $region24: #{tpu_custom_call.1} parent=1 // pred_region
      %34 = dma.done [#allocation4], 4096
    $region25: #{tpu_custom_call.1} parent=1 // pred_fallthru
      _
    %p35 = scmp.eq.s32.totalorder 0, 0
    // Predicated region
    $region26: #{tpu_custom_call.1} parent=1 // pred_check
      %p36 = pneg %p35
    $region27: #{tpu_custom_call.1} parent=1 // pred_check_branch
      %38 = sbr.rel (%p36) target = $region29
    $region28: #{tpu_custom_call.1} parent=1 // pred_region
      %39 = vst [vmem:[#allocation2] sm:$0xff] 0.0
      %40 = vst [vmem:[#allocation2 + $0x8] sm:$0xff] 0.0
      %41 = vst [vmem:[#allocation2 + $0x10] sm:$0xff] 0.0
      %42 = vst [vmem:[#allocation2 + $0x18] sm:$0xff] 0.0
      %43 = vst [vmem:[#allocation2 + $0x20] sm:$0xff] 0.0
      %44 = vst [vmem:[#allocation2 + $0x28] sm:$0xff] 0.0
      %45 = vst [vmem:[#allocation2 + $0x30] sm:$0xff] 0.0
      %46 = vst [vmem:[#allocation2 + $0x38] sm:$0xff] 0.0
      %47 = vst [vmem:[#allocation2 + $0x40] sm:$0xff] 0.0
      %48 = vst [vmem:[#allocation2 + $0x48] sm:$0xff] 0.0
      %49 = vst [vmem:[#allocation2 + $0x50] sm:$0xff] 0.0
      %50 = vst [vmem:[#allocation2 + $0x58] sm:$0xff] 0.0
      %51 = vst [vmem:[#allocation2 + $0x60] sm:$0xff] 0.0
      %52 = vst [vmem:[#allocation2 + $0x68] sm:$0xff] 0.0
      %53 = vst [vmem:[#allocation2 + $0x70] sm:$0xff] 0.0
      %54 = vst [vmem:[#allocation2 + $0x78] sm:$0xff] 0.0
    $region29: #{tpu_custom_call.1} parent=1 // pred_fallthru
      _
    %v55 = vld [vmem:[#allocation3] sm:$0xff]
    %v56 = vld [vmem:[#allocation3 + $0x8] sm:$0xff]
    %v57 = vld [vmem:[#allocation3 + $0x10] sm:$0xff]
    %v58 = vld [vmem:[#allocation3 + $0x18] sm:$0xff]
    %v59 = vld [vmem:[#allocation3 + $0x20] sm:$0xff]
    %v60 = vld [vmem:[#allocation3 + $0x28] sm:$0xff]
    %v61 = vld [vmem:[#allocation3 + $0x30] sm:$0xff]
    %v62 = vld [vmem:[#allocation3 + $0x38] sm:$0xff]
    %v63 = vld [vmem:[#allocation3 + $0x40] sm:$0xff]
    %v64 = vld [vmem:[#allocation3 + $0x48] sm:$0xff]
    %v65 = vld [vmem:[#allocation3 + $0x50] sm:$0xff]
    %v66 = vld [vmem:[#allocation3 + $0x58] sm:$0xff]
    %v67 = vld [vmem:[#allocation3 + $0x60] sm:$0xff]
    %v68 = vld [vmem:[#allocation3 + $0x68] sm:$0xff]
    %v69 = vld [vmem:[#allocation3 + $0x70] sm:$0xff]
    %v70 = vld [vmem:[#allocation3 + $0x78] sm:$0xff]
    %v71 = vld [vmem:[#allocation3 + $0x80] sm:$0xff]
    %v72 = vld [vmem:[#allocation3 + $0x88] sm:$0xff]
    %v73 = vld [vmem:[#allocation3 + $0x90] sm:$0xff]
    %v74 = vld [vmem:[#allocation3 + $0x98] sm:$0xff]
    %v75 = vld [vmem:[#allocation3 + $0xa0] sm:$0xff]
    %v76 = vld [vmem:[#allocation3 + $0xa8] sm:$0xff]
    %v77 = vld [vmem:[#allocation3 + $0xb0] sm:$0xff]
    %v78 = vld [vmem:[#allocation3 + $0xb8] sm:$0xff]
    %v79 = vld [vmem:[#allocation3 + $0xc0] sm:$0xff]
    %v80 = vld [vmem:[#allocation3 + $0xc8] sm:$0xff]
    %v81 = vld [vmem:[#allocation3 + $0xd0] sm:$0xff]
    %v82 = vld [vmem:[#allocation3 + $0xd8] sm:$0xff]
    %v83 = vld [vmem:[#allocation3 + $0xe0] sm:$0xff]
    %v84 = vld [vmem:[#allocation3 + $0xe8] sm:$0xff]
    %v85 = vld [vmem:[#allocation3 + $0xf0] sm:$0xff]
    %v86 = vld [vmem:[#allocation3 + $0xf8] sm:$0xff]
    %v87 = vld [vmem:[#allocation2] sm:$0xff]
    %v88 = vld [vmem:[#allocation2 + $0x8] sm:$0xff]
    %v89 = vld [vmem:[#allocation2 + $0x10] sm:$0xff]
    %v90 = vld [vmem:[#allocation2 + $0x18] sm:$0xff]
    %v91 = vld [vmem:[#allocation2 + $0x20] sm:$0xff]
    %v92 = vld [vmem:[#allocation2 + $0x28] sm:$0xff]
    %v93 = vld [vmem:[#allocation2 + $0x30] sm:$0xff]
    %v94 = vld [vmem:[#allocation2 + $0x38] sm:$0xff]
    %v95 = vld [vmem:[#allocation2 + $0x40] sm:$0xff]
    %v96 = vld [vmem:[#allocation2 + $0x48] sm:$0xff]
    %v97 = vld [vmem:[#allocation2 + $0x50] sm:$0xff]
    %v98 = vld [vmem:[#allocation2 + $0x58] sm:$0xff]
    %v99 = vld [vmem:[#allocation2 + $0x60] sm:$0xff]
    %v100 = vld [vmem:[#allocation2 + $0x68] sm:$0xff]
    %v101 = vld [vmem:[#allocation2 + $0x70] sm:$0xff]
    %v102 = vld [vmem:[#allocation2 + $0x78] sm:$0xff]
    %103 = vmatprep.subr.mxu0 %v86
    %104 = vmatpush1.xpose.msra.mxu0 %v85
    %105 = vmatprep.subr.mxu0 %v84
    %106 = vmatpush1.xpose.msra.mxu0 %v83
    %107 = vmatprep.subr.mxu0 %v82
    %108 = vmatpush1.xpose.msra.mxu0 %v81
    %109 = vmatprep.subr.mxu0 %v80
    %110 = vmatpush1.xpose.msra.mxu0 %v79
    %111 = vmatprep.subr.mxu0 %v78
    %112 = vmatpush1.xpose.msra.mxu0 %v77
    %113 = vmatprep.subr.mxu0 %v76
    %114 = vmatpush1.xpose.msra.mxu0 %v75
    %115 = vmatprep.subr.mxu0 %v74
    %116 = vmatpush1.xpose.msra.mxu0 %v73
    %117 = vmatprep.subr.mxu0 %v72
    %118 = vmatpush1.xpose.msra.mxu0 %v71
    %119 = vmatprep.subr.mxu0 %v70
    %120 = vmatpush1.xpose.msra.mxu0 %v69
    %121 = vmatprep.subr.mxu0 %v68
    %122 = vmatpush1.xpose.msra.mxu0 %v67
    %123 = vmatprep.subr.mxu0 %v66
    %124 = vmatpush1.xpose.msra.mxu0 %v65
    %125 = vmatprep.subr.mxu0 %v64
    %126 = vmatpush1.xpose.msra.mxu0 %v63
    %127 = vmatprep.subr.mxu0 %v62
    %128 = vmatpush1.xpose.msra.mxu0 %v61
    %129 = vmatprep.subr.mxu0 %v60
    %130 = vmatpush1.xpose.msra.mxu0 %v59
    %131 = vmatprep.subr.mxu0 %v58
    %132 = vmatpush1.xpose.msra.mxu0 %v57
    %133 = vmatprep.subr.mxu0 %v56
    %134 = vmatpush1.xpose.msra.mxu0 %v55
    %135 = vmatprep.subr.mxu0 0.0
    %136 = vmatpush2.xpose.msra.mxu0 0.0
    %137 = vmatprep.subr.mxu0 0.0
    %138 = vmatpush2.xpose.msra.mxu0 0.0
    %139 = vmatprep.subr.mxu0 0.0
    %140 = vmatpush2.xpose.msra.mxu0 0.0
    %141 = vmatprep.subr.mxu0 0.0
    %142 = vmatpush2.xpose.msra.mxu0 0.0
    %143 = vmatprep.subr.mxu0 0.0
    %144 = vmatpush2.xpose.msra.mxu0 0.0
    %145 = vmatprep.subr.mxu0 0.0
    %146 = vmatpush2.xpose.msra.mxu0 0.0
    %147 = vmatprep.subr.mxu0 0.0
    %148 = vmatpush2.xpose.msra.mxu0 0.0
    %149 = vmatprep.subr.mxu0 0.0
    %150 = vmatpush2.xpose.msra.mxu0 0.0
    %151 = vmatprep.subr.mxu0 0.0
    %152 = vmatpush2.xpose.msra.mxu0 0.0
    %153 = vmatprep.subr.mxu0 0.0
    %154 = vmatpush2.xpose.msra.mxu0 0.0
    %155 = vmatprep.subr.mxu0 0.0
    %156 = vmatpush2.xpose.msra.mxu0 0.0
    %157 = vmatprep.subr.mxu0 0.0
    %158 = vmatpush2.xpose.msra.mxu0 0.0
    %159 = vmatprep.subr.mxu0 0.0
    %160 = vmatpush2.xpose.msra.mxu0 0.0
    %161 = vmatprep.subr.mxu0 0.0
    %162 = vmatpush2.xpose.msra.mxu0 0.0
    %163 = vmatprep.subr.mxu0 0.0
    %164 = vmatpush2.xpose.msra.mxu0 0.0
    %165 = vmatprep.subr.mxu0 0.0
    %166 = vmatpush2.xpose.msra.mxu0 0.0
    %167 = vmatprep.mubr.f32.mxu0 %v56
    %168 = vmatmul.mubr.f32.gmra.mxu0 %v55
    %v169 = vpop.f32.mrf.mxu0
    %v170 = vadd.f32 0.0, %v169
    %v171 = vpop.f32.mrf.mxu0
    %172 = vmatprep.mubr.f32.mxu0 %v58
    %173 = vmatmul.mubr.f32.gmra.mxu0 %v57
    %v174 = vpop.f32.mrf.mxu0
    %v175 = vadd.f32 0.0, %v174
    %v176 = vpop.f32.mrf.mxu0
    %177 = vmatprep.mubr.f32.mxu0 %v60
    %178 = vmatmul.mubr.f32.gmra.mxu0 %v59
    %v179 = vpop.f32.mrf.mxu0
    %v180 = vadd.f32 0.0, %v179
    %v181 = vpop.f32.mrf.mxu0
    %182 = vmatprep.mubr.f32.mxu0 %v62
    %183 = vmatmul.mubr.f32.gmra.mxu0 %v61
    %v184 = vpop.f32.mrf.mxu0
    %v185 = vadd.f32 0.0, %v184
    %v186 = vpop.f32.mrf.mxu0
    %187 = vmatprep.mubr.f32.mxu0 %v64
    %188 = vmatmul.mubr.f32.gmra.mxu0 %v63
    %v189 = vpop.f32.mrf.mxu0
    %v190 = vadd.f32 0.0, %v189
    %v191 = vpop.f32.mrf.mxu0
    %192 = vmatprep.mubr.f32.mxu0 %v66
    %193 = vmatmul.mubr.f32.gmra.mxu0 %v65
    %v194 = vpop.f32.mrf.mxu0
    %v195 = vadd.f32 0.0, %v194
    %v196 = vpop.f32.mrf.mxu0
    %197 = vmatprep.mubr.f32.mxu0 %v68
    %198 = vmatmul.mubr.f32.gmra.mxu0 %v67
    %v199 = vpop.f32.mrf.mxu0
    %v200 = vadd.f32 0.0, %v199
    %v201 = vpop.f32.mrf.mxu0
    %202 = vmatprep.mubr.f32.mxu0 %v70
    %203 = vmatmul.mubr.f32.gmra.mxu0 %v69
    %v204 = vpop.f32.mrf.mxu0
    %v205 = vadd.f32 0.0, %v204
    %v206 = vpop.f32.mrf.mxu0
    %207 = vmatprep.mubr.f32.mxu0 %v72
    %208 = vmatmul.mubr.f32.gmra.mxu0 %v71
    %v209 = vpop.f32.mrf.mxu0
    %v210 = vadd.f32 0.0, %v209
    %v211 = vpop.f32.mrf.mxu0
    %212 = vmatprep.mubr.f32.mxu0 %v74
    %213 = vmatmul.mubr.f32.gmra.mxu0 %v73
    %v214 = vpop.f32.mrf.mxu0
    %v215 = vadd.f32 0.0, %v214
    %v216 = vpop.f32.mrf.mxu0
    %217 = vmatprep.mubr.f32.mxu0 %v76
    %218 = vmatmul.mubr.f32.gmra.mxu0 %v75
    %v219 = vpop.f32.mrf.mxu0
    %v220 = vadd.f32 0.0, %v219
    %v221 = vpop.f32.mrf.mxu0
    %222 = vmatprep.mubr.f32.mxu0 %v78
    %223 = vmatmul.mubr.f32.gmra.mxu0 %v77
    %v224 = vpop.f32.mrf.mxu0
    %v225 = vadd.f32 0.0, %v224
    %v226 = vpop.f32.mrf.mxu0
    %227 = vmatprep.mubr.f32.mxu0 %v80
    %228 = vmatmul.mubr.f32.gmra.mxu0 %v79
    %v229 = vpop.f32.mrf.mxu0
    %v230 = vadd.f32 0.0, %v229
    %v231 = vpop.f32.mrf.mxu0
    %232 = vmatprep.mubr.f32.mxu0 %v82
    %233 = vmatmul.mubr.f32.gmra.mxu0 %v81
    %v234 = vpop.f32.mrf.mxu0
    %v235 = vadd.f32 0.0, %v234
    %v236 = vpop.f32.mrf.mxu0
    %237 = vmatprep.mubr.f32.mxu0 %v84
    %238 = vmatmul.mubr.f32.gmra.mxu0 %v83
    %v239 = vpop.f32.mrf.mxu0
    %v240 = vadd.f32 0.0, %v239
    %v241 = vpop.f32.mrf.mxu0
    %242 = vmatprep.mubr.f32.mxu0 %v86
    %243 = vmatmul.mubr.f32.gmra.mxu0 %v85
    %v244 = vpop.f32.mrf.mxu0
    %v245 = vadd.f32 0.0, %v244
    %v246 = vpop.f32.mrf.mxu0
    %247 = vdwg.mxu0
    %v248 = vadd.f32 %v87, %v170
    %v249 = vadd.f32 %v88, %v175
    %v250 = vadd.f32 %v89, %v180
    %v251 = vadd.f32 %v90, %v185
    %v252 = vadd.f32 %v91, %v190
    %v253 = vadd.f32 %v92, %v195
    %v254 = vadd.f32 %v93, %v200
    %v255 = vadd.f32 %v94, %v205
    %v256 = vadd.f32 %v95, %v210
    %v257 = vadd.f32 %v96, %v215
    %v258 = vadd.f32 %v97, %v220
    %v259 = vadd.f32 %v98, %v225
    %v260 = vadd.f32 %v99, %v230
    %v261 = vadd.f32 %v100, %v235
    %v262 = vadd.f32 %v101, %v240
    %v263 = vadd.f32 %v102, %v245
    %264 = vst [vmem:[#allocation2] sm:$0xff] %v248
    %265 = vst [vmem:[#allocation2 + $0x8] sm:$0xff] %v249
    %266 = vst [vmem:[#allocation2 + $0x10] sm:$0xff] %v250
    %267 = vst [vmem:[#allocation2 + $0x18] sm:$0xff] %v251
    %268 = vst [vmem:[#allocation2 + $0x20] sm:$0xff] %v252
    %269 = vst [vmem:[#allocation2 + $0x28] sm:$0xff] %v253
    %270 = vst [vmem:[#allocation2 + $0x30] sm:$0xff] %v254
    %271 = vst [vmem:[#allocation2 + $0x38] sm:$0xff] %v255
    %272 = vst [vmem:[#allocation2 + $0x40] sm:$0xff] %v256
    %273 = vst [vmem:[#allocation2 + $0x48] sm:$0xff] %v257
    %274 = vst [vmem:[#allocation2 + $0x50] sm:$0xff] %v258
    %275 = vst [vmem:[#allocation2 + $0x58] sm:$0xff] %v259
    %276 = vst [vmem:[#allocation2 + $0x60] sm:$0xff] %v260
    %277 = vst [vmem:[#allocation2 + $0x68] sm:$0xff] %v261
    %278 = vst [vmem:[#allocation2 + $0x70] sm:$0xff] %v262
    %279 = vst [vmem:[#allocation2 + $0x78] sm:$0xff] %v263
    // Predicated region
    $region30: #{tpu_custom_call.1} parent=1 // pred_check
      %p280 = pneg %p35
    $region31: #{tpu_custom_call.1} parent=1 // pred_check_branch
      %282 = sbr.rel (%p280) target = $region33
    $region32: #{tpu_custom_call.1} parent=1 // pred_region
      %v283 = vld [vmem:[%s3] sm:$0x1]
      %v284 = vld [vmem:[%s4] sm:$0x1]
      %v285 = vlaneseq
      %v286 = vshrl.u32 %v285, 7
      %v287 = vlaneseq
      %v288 = vshrl.u32 %v287, 7
      %v289 = vsub.s32 0, %v288
      %v290 = vrot.slane %v283, %v289
      %vm291 = vcmp.eq.s32.totalorder %v286, %v290
      %v292 = vsel %vm291, 1, 0
      %v293 = vcvt.s32.f32 %v292
      %294 = vadd.xlane.f32.xlu0 %v293
      %v295 = vpop.xlane.xlu0 %294
      %v296 = vld [vmem:[#allocation2] sm:$0xff]
      %v297 = vld [vmem:[#allocation2 + $0x8] sm:$0xff]
      %v298 = vld [vmem:[#allocation2 + $0x10] sm:$0xff]
      %v299 = vld [vmem:[#allocation2 + $0x18] sm:$0xff]
      %v300 = vld [vmem:[#allocation2 + $0x20] sm:$0xff]
      %v301 = vld [vmem:[#allocation2 + $0x28] sm:$0xff]
      %v302 = vld [vmem:[#allocation2 + $0x30] sm:$0xff]
      %v303 = vld [vmem:[#allocation2 + $0x38] sm:$0xff]
      %v304 = vld [vmem:[#allocation2 + $0x40] sm:$0xff]
      %v305 = vld [vmem:[#allocation2 + $0x48] sm:$0xff]
      %v306 = vld [vmem:[#allocation2 + $0x50] sm:$0xff]
      %v307 = vld [vmem:[#allocation2 + $0x58] sm:$0xff]
      %v308 = vld [vmem:[#allocation2 + $0x60] sm:$0xff]
      %v309 = vld [vmem:[#allocation2 + $0x68] sm:$0xff]
      %v310 = vld [vmem:[#allocation2 + $0x70] sm:$0xff]
      %v311 = vld [vmem:[#allocation2 + $0x78] sm:$0xff]
      %v312 = vld [vmem:[%s1] sm:$0xff]
      %v313 = vld [vmem:[%s1 + $0x8] sm:$0xff]
      %v314 = vld [vmem:[%s1 + $0x10] sm:$0xff]
      %v315 = vld [vmem:[%s1 + $0x18] sm:$0xff]
      %v316 = vld [vmem:[%s1 + $0x20] sm:$0xff]
      %v317 = vld [vmem:[%s1 + $0x28] sm:$0xff]
      %v318 = vld [vmem:[%s1 + $0x30] sm:$0xff]
      %v319 = vld [vmem:[%s1 + $0x38] sm:$0xff]
      %v320 = vld [vmem:[%s1 + $0x40] sm:$0xff]
      %v321 = vld [vmem:[%s1 + $0x48] sm:$0xff]
      %v322 = vld [vmem:[%s1 + $0x50] sm:$0xff]
      %v323 = vld [vmem:[%s1 + $0x58] sm:$0xff]
      %v324 = vld [vmem:[%s1 + $0x60] sm:$0xff]
      %v325 = vld [vmem:[%s1 + $0x68] sm:$0xff]
      %v326 = vld [vmem:[%s1 + $0x70] sm:$0xff]
      %v327 = vld [vmem:[%s1 + $0x78] sm:$0xff]
      %v328 = vld [vmem:[%s2] sm:$0x1]
      %330 = vset.pattern.permute.xlu0 0
      %331 = vperm.xlu0 %330, %v312
      %v332 = vpop.permute.xlu0 %331
      %335 = vset.pattern.permute.xlu0 0
      %336 = vperm.xlu0 %335, %v313
      %v337 = vpop.permute.xlu0 %336
      %340 = vset.pattern.permute.xlu0 0
      %341 = vperm.xlu0 %340, %v314
      %v342 = vpop.permute.xlu0 %341
      %345 = vset.pattern.permute.xlu0 0
      %346 = vperm.xlu0 %345, %v315
      %v347 = vpop.permute.xlu0 %346
      %350 = vset.pattern.permute.xlu0 0
      %351 = vperm.xlu0 %350, %v316
      %v352 = vpop.permute.xlu0 %351
      %355 = vset.pattern.permute.xlu0 0
      %356 = vperm.xlu0 %355, %v317
      %v357 = vpop.permute.xlu0 %356
      %360 = vset.pattern.permute.xlu0 0
      %361 = vperm.xlu0 %360, %v318
      %v362 = vpop.permute.xlu0 %361
      %365 = vset.pattern.permute.xlu0 0
      %366 = vperm.xlu0 %365, %v319
      %v367 = vpop.permute.xlu0 %366
      %370 = vset.pattern.permute.xlu0 0
      %371 = vperm.xlu0 %370, %v320
      %v372 = vpop.permute.xlu0 %371
      %375 = vset.pattern.permute.xlu0 0
      %376 = vperm.xlu0 %375, %v321
      %v377 = vpop.permute.xlu0 %376
      %380 = vset.pattern.permute.xlu0 0
      %381 = vperm.xlu0 %380, %v322
      %v382 = vpop.permute.xlu0 %381
      %385 = vset.pattern.permute.xlu0 0
      %386 = vperm.xlu0 %385, %v323
      %v387 = vpop.permute.xlu0 %386
      %390 = vset.pattern.permute.xlu0 0
      %391 = vperm.xlu0 %390, %v324
      %v392 = vpop.permute.xlu0 %391
      %395 = vset.pattern.permute.xlu0 0
      %396 = vperm.xlu0 %395, %v325
      %v397 = vpop.permute.xlu0 %396
      %400 = vset.pattern.permute.xlu0 0
      %401 = vperm.xlu0 %400, %v326
      %v402 = vpop.permute.xlu0 %401
      %405 = vset.pattern.permute.xlu0 0
      %406 = vperm.xlu0 %405, %v327
      %v407 = vpop.permute.xlu0 %406
      %v410 = vlaneseq
      %v411 = vshrl.u32 %v410, 7
      %v412 = vsub.s32 0, %v411
      %v413 = vrot.slane %v328, %v412
      %v415 = vadd.f32 %v332, %v413
      %v416 = vadd.f32 %v337, %v413
      %v417 = vadd.f32 %v342, %v413
      %v418 = vadd.f32 %v347, %v413
      %v419 = vadd.f32 %v352, %v413
      %v420 = vadd.f32 %v357, %v413
      %v421 = vadd.f32 %v362, %v413
      %v422 = vadd.f32 %v367, %v413
      %v423 = vadd.f32 %v372, %v413
      %v424 = vadd.f32 %v377, %v413
      %v425 = vadd.f32 %v382, %v413
      %v426 = vadd.f32 %v387, %v413
      %v427 = vadd.f32 %v392, %v413
      %v428 = vadd.f32 %v397, %v413
      %v429 = vadd.f32 %v402, %v413
      %v430 = vadd.f32 %v407, %v413
      %v431 = vmul.f32 %v296, 2.0
      %v432 = vmul.f32 %v297, 2.0
      %v433 = vmul.f32 %v298, 2.0
      %v434 = vmul.f32 %v299, 2.0
      %v435 = vmul.f32 %v300, 2.0
      %v436 = vmul.f32 %v301, 2.0
      %v437 = vmul.f32 %v302, 2.0
      %v438 = vmul.f32 %v303, 2.0
      %v439 = vmul.f32 %v304, 2.0
      %v440 = vmul.f32 %v305, 2.0
      %v441 = vmul.f32 %v306, 2.0
      %v442 = vmul.f32 %v307, 2.0
      %v443 = vmul.f32 %v308, 2.0
      %v444 = vmul.f32 %v309, 2.0
      %v445 = vmul.f32 %v310, 2.0
      %v446 = vmul.f32 %v311, 2.0
      %v447 = vsub.f32 %v415, %v431
      %v448 = vsub.f32 %v416, %v432
      %v449 = vsub.f32 %v417, %v433
      %v450 = vsub.f32 %v418, %v434
      %v451 = vsub.f32 %v419, %v435
      %v452 = vsub.f32 %v420, %v436
      %v453 = vsub.f32 %v421, %v437
      %v454 = vsub.f32 %v422, %v438
      %v455 = vsub.f32 %v423, %v439
      %v456 = vsub.f32 %v424, %v440
      %v457 = vsub.f32 %v425, %v441
      %v458 = vsub.f32 %v426, %v442
      %v459 = vsub.f32 %v427, %v443
      %v460 = vsub.f32 %v428, %v444
      %v461 = vsub.f32 %v429, %v445
      %v462 = vsub.f32 %v430, %v446
      %v463 = vmax.f32 %v447, 1e-12
      %v464 = vmax.f32 %v448, 1e-12
      %v465 = vmax.f32 %v449, 1e-12
      %v466 = vmax.f32 %v450, 1e-12
      %v467 = vmax.f32 %v451, 1e-12
      %v468 = vmax.f32 %v452, 1e-12
      %v469 = vmax.f32 %v453, 1e-12
      %v470 = vmax.f32 %v454, 1e-12
      %v471 = vmax.f32 %v455, 1e-12
      %v472 = vmax.f32 %v456, 1e-12
      %v473 = vmax.f32 %v457, 1e-12
      %v474 = vmax.f32 %v458, 1e-12
      %v475 = vmax.f32 %v459, 1e-12
      %v476 = vmax.f32 %v460, 1e-12
      %v477 = vmax.f32 %v461, 1e-12
      %v478 = vmax.f32 %v462, 1e-12
      %479 = vst [vmem:[#allocation2] sm:$0xff] %v463
      %480 = vst [vmem:[#allocation2 + $0x8] sm:$0xff] %v464
      %481 = vst [vmem:[#allocation2 + $0x10] sm:$0xff] %v465
      %482 = vst [vmem:[#allocation2 + $0x18] sm:$0xff] %v466
      %483 = vst [vmem:[#allocation2 + $0x20] sm:$0xff] %v467
      %484 = vst [vmem:[#allocation2 + $0x28] sm:$0xff] %v468
      %485 = vst [vmem:[#allocation2 + $0x30] sm:$0xff] %v469
      %486 = vst [vmem:[#allocation2 + $0x38] sm:$0xff] %v470
      %487 = vst [vmem:[#allocation2 + $0x40] sm:$0xff] %v471
      %488 = vst [vmem:[#allocation2 + $0x48] sm:$0xff] %v472
      %489 = vst [vmem:[#allocation2 + $0x50] sm:$0xff] %v473
      %490 = vst [vmem:[#allocation2 + $0x58] sm:$0xff] %v474
      %491 = vst [vmem:[#allocation2 + $0x60] sm:$0xff] %v475
      %492 = vst [vmem:[#allocation2 + $0x68] sm:$0xff] %v476
      %493 = vst [vmem:[#allocation2 + $0x70] sm:$0xff] %v477
      %494 = vst [vmem:[#allocation2 + $0x78] sm:$0xff] %v478
      %v495 = vld [vmem:[#allocation2] sm:$0xff]
      %v496 = vld [vmem:[#allocation2 + $0x8] sm:$0xff]
      %v497 = vld [vmem:[#allocation2 + $0x10] sm:$0xff]
      %v498 = vld [vmem:[#allocation2 + $0x18] sm:$0xff]
      %v499 = vld [vmem:[#allocation2 + $0x20] sm:$0xff]
      %v500 = vld [vmem:[#allocation2 + $0x28] sm:$0xff]
      %v501 = vld [vmem:[#allocation2 + $0x30] sm:$0xff]
      %v502 = vld [vmem:[#allocation2 + $0x38] sm:$0xff]
      %v503 = vld [vmem:[#allocation2 + $0x40] sm:$0xff]
      %v504 = vld [vmem:[#allocation2 + $0x48] sm:$0xff]
      %v505 = vld [vmem:[#allocation2 + $0x50] sm:$0xff]
      %v506 = vld [vmem:[#allocation2 + $0x58] sm:$0xff]
      %v507 = vld [vmem:[#allocation2 + $0x60] sm:$0xff]
      %v508 = vld [vmem:[#allocation2 + $0x68] sm:$0xff]
      %v509 = vld [vmem:[#allocation2 + $0x70] sm:$0xff]
      %v510 = vld [vmem:[#allocation2 + $0x78] sm:$0xff]
      %511 = vmatprep.subr.mxu0 0.0
      %512 = vmatpush1.msra.mxu0 %v510
      %513 = vmatprep.subr.mxu0 0.0
      %514 = vmatpush1.msra.mxu0 %v509
      %515 = vmatprep.subr.mxu0 0.0
      %516 = vmatpush1.msra.mxu0 %v508
      %517 = vmatprep.subr.mxu0 0.0
      %518 = vmatpush1.msra.mxu0 %v507
      %519 = vmatprep.subr.mxu0 0.0
      %520 = vmatpush1.msra.mxu0 %v506
      %521 = vmatprep.subr.mxu0 0.0
      %522 = vmatpush1.msra.mxu0 %v505
      %523 = vmatprep.subr.mxu0 0.0
      %524 = vmatpush1.msra.mxu0 %v504
      %525 = vmatprep.subr.mxu0 0.0
      %526 = vmatpush1.msra.mxu0 %v503
      %527 = vmatprep.subr.mxu0 0.0
      %528 = vmatpush1.msra.mxu0 %v502
      %529 = vmatprep.subr.mxu0 0.0
      %530 = vmatpush1.msra.mxu0 %v501
      %531 = vmatprep.subr.mxu0 0.0
      %532 = vmatpush1.msra.mxu0 %v500
      %533 = vmatprep.subr.mxu0 0.0
      %534 = vmatpush1.msra.mxu0 %v499
      %535 = vmatprep.subr.mxu0 0.0
      %536 = vmatpush1.msra.mxu0 %v498
      %537 = vmatprep.subr.mxu0 0.0
      %538 = vmatpush1.msra.mxu0 %v497
      %539 = vmatprep.subr.mxu0 0.0
      %540 = vmatpush1.msra.mxu0 %v496
      %541 = vmatprep.subr.mxu0 0.0
      %542 = vmatpush1.msra.mxu0 %v495
      %543 = vmatprep.subr.mxu0 0.0
      %544 = vmatpush2.msra.mxu0 0.0
      %545 = vmatprep.subr.mxu0 0.0
      %546 = vmatpush2.msra.mxu0 0.0
      %547 = vmatprep.subr.mxu0 0.0
      %548 = vmatpush2.msra.mxu0 0.0
      %549 = vmatprep.subr.mxu0 0.0
      %550 = vmatpush2.msra.mxu0 0.0
      %551 = vmatprep.subr.mxu0 0.0
      %552 = vmatpush2.msra.mxu0 0.0
      %553 = vmatprep.subr.mxu0 0.0
      %554 = vmatpush2.msra.mxu0 0.0
      %555 = vmatprep.subr.mxu0 0.0
      %556 = vmatpush2.msra.mxu0 0.0
      %557 = vmatprep.subr.mxu0 0.0
      %558 = vmatpush2.msra.mxu0 0.0
      %559 = vmatprep.subr.mxu0 0.0
      %560 = vmatpush2.msra.mxu0 0.0
      %561 = vmatprep.subr.mxu0 0.0
      %562 = vmatpush2.msra.mxu0 0.0
      %563 = vmatprep.subr.mxu0 0.0
      %564 = vmatpush2.msra.mxu0 0.0
      %565 = vmatprep.subr.mxu0 0.0
      %566 = vmatpush2.msra.mxu0 0.0
      %567 = vmatprep.subr.mxu0 0.0
      %568 = vmatpush2.msra.mxu0 0.0
      %569 = vmatprep.subr.mxu0 0.0
      %570 = vmatpush2.msra.mxu0 0.0
      %571 = vmatprep.subr.mxu0 0.0
      %572 = vmatpush2.msra.mxu0 0.0
      %573 = vmatprep.subr.mxu0 0.0
      %574 = vmatpush2.msra.mxu0 0.0
      %575 = vmatprep.mubr.f32.mxu0 0.0
      %576 = vmatmul.mubr.f32.gmra.mxu0 %v293
      %v577 = vpop.f32.mrf.mxu0
      %v578 = vadd.f32 0.0, %v577
      %v579 = vpop.f32.mrf.mxu0
      %580 = vdwg.mxu0
      %vm581 = vcmp.eq.s32.totalorder %v284, 0
      %v582 = vsel %vm581, 1, 0
      %v583 = vcvt.s32.f32 %v582
      %v585 = vlaneseq
      %v586 = vshrl.u32 %v585, 7
      %v587 = vsub.s32 0, %v586
      %v588 = vrot.slane %v583, %v587
      %v590 = vmul.f32 %v293, %v588
      %591 = vadd.xlane.f32.xlu0 %v590
      %v592 = vpop.xlane.xlu0 %591
      %v593 = vmul.f32 %v590, %v578
      %594 = vadd.xlane.f32.xlu0 %v593
      %v595 = vpop.xlane.xlu0 %594
      %vm596 = vcmp.gt.f32.partialorder %v592, 0.0
      %v597 = vmul.f32 %v295, %v592
      %v598 = vmax.f32 %v597, 1.0
      %v599 = vrcp.pop %v598
      %v600 = vmul.f32 %v595, %v599
      %v601 = vsel %vm596, %v600, 1.0
      %v602 = vmax.f32 %v601, 1e-12
      %v603 = vmul.f32 %v602, 2.0
      %v604 = vrcp.pop %v603
      %v605 = vmul.f32 1.0, %v604
      %v606 = vmul.f32 %v293, %v605
      %v607 = vrot.slane %v606, 4
      %v608 = vadd.f32 %v606, %v607
      %v609 = vrot.slane %v608, 2
      %v610 = vadd.f32 %v608, %v609
      %v611 = vrot.slane %v610, 1
      %v612 = vadd.f32 %v610, %v611
      %v613 = vsub.f32 0.0, %v495
      %v614 = vsub.f32 0.0, %v496
      %v615 = vsub.f32 0.0, %v497
      %v616 = vsub.f32 0.0, %v498
      %v617 = vsub.f32 0.0, %v499
      %v618 = vsub.f32 0.0, %v500
      %v619 = vsub.f32 0.0, %v501
      %v620 = vsub.f32 0.0, %v502
      %v621 = vsub.f32 0.0, %v503
      %v622 = vsub.f32 0.0, %v504
      %v623 = vsub.f32 0.0, %v505
      %v624 = vsub.f32 0.0, %v506
      %v625 = vsub.f32 0.0, %v507
      %v626 = vsub.f32 0.0, %v508
      %v627 = vsub.f32 0.0, %v509
      %v628 = vsub.f32 0.0, %v510
      %v629 = vmul.f32 %v613, %v612
      %v630 = vmul.f32 %v614, %v612
      %v631 = vmul.f32 %v615, %v612
      %v632 = vmul.f32 %v616, %v612
      %v633 = vmul.f32 %v617, %v612
      %v634 = vmul.f32 %v618, %v612
      %v635 = vmul.f32 %v619, %v612
      %v636 = vmul.f32 %v620, %v612
      %v637 = vmul.f32 %v621, %v612
      %v638 = vmul.f32 %v622, %v612
      %v639 = vmul.f32 %v623, %v612
      %v640 = vmul.f32 %v624, %v612
      %v641 = vmul.f32 %v625, %v612
      %v642 = vmul.f32 %v626, %v612
      %v643 = vmul.f32 %v627, %v612
      %v644 = vmul.f32 %v628, %v612
      %v645 = vmul.f32 %v629, 1.442695
      %v646 = vpow.pop %v645
      %v647 = vmul.f32 %v630, 1.442695
      %v648 = vpow.pop %v647
      %v649 = vmul.f32 %v631, 1.442695
      %v650 = vpow.pop %v649
      %v651 = vmul.f32 %v632, 1.442695
      %v652 = vpow.pop %v651
      %v653 = vmul.f32 %v633, 1.442695
      %v654 = vpow.pop %v653
      %v655 = vmul.f32 %v634, 1.442695
      %v656 = vpow.pop %v655
      %v657 = vmul.f32 %v635, 1.442695
      %v658 = vpow.pop %v657
      %v659 = vmul.f32 %v636, 1.442695
      %v660 = vpow.pop %v659
      %v661 = vmul.f32 %v637, 1.442695
      %v662 = vpow.pop %v661
      %v663 = vmul.f32 %v638, 1.442695
      %v664 = vpow.pop %v663
      %v665 = vmul.f32 %v639, 1.442695
      %v666 = vpow.pop %v665
      %v667 = vmul.f32 %v640, 1.442695
      %v668 = vpow.pop %v667
      %v669 = vmul.f32 %v641, 1.442695
      %v670 = vpow.pop %v669
      %v671 = vmul.f32 %v642, 1.442695
      %v672 = vpow.pop %v671
      %v673 = vmul.f32 %v643, 1.442695
      %v674 = vpow.pop %v673
      %v675 = vmul.f32 %v644, 1.442695
      %v676 = vpow.pop %v675
      %677 = vmatprep.subr.mxu0 0.0
      %678 = vmatpush1.msra.mxu0 %v676
      %679 = vmatprep.subr.mxu0 0.0
      %680 = vmatpush1.msra.mxu0 %v674
      %681 = vmatprep.subr.mxu0 0.0
      %682 = vmatpush1.msra.mxu0 %v672
      %683 = vmatprep.subr.mxu0 0.0
      %684 = vmatpush1.msra.mxu0 %v670
      %685 = vmatprep.subr.mxu0 0.0
      %686 = vmatpush1.msra.mxu0 %v668
      %687 = vmatprep.subr.mxu0 0.0
      %688 = vmatpush1.msra.mxu0 %v666
      %689 = vmatprep.subr.mxu0 0.0
      %690 = vmatpush1.msra.mxu0 %v664
      %691 = vmatprep.subr.mxu0 0.0
      %692 = vmatpush1.msra.mxu0 %v662
      %693 = vmatprep.subr.mxu0 0.0
      %694 = vmatpush1.msra.mxu0 %v660
      %695 = vmatprep.subr.mxu0 0.0
      %696 = vmatpush1.msra.mxu0 %v658
      %697 = vmatprep.subr.mxu0 0.0
      %698 = vmatpush1.msra.mxu0 %v656
      %699 = vmatprep.subr.mxu0 0.0
      %700 = vmatpush1.msra.mxu0 %v654
      %701 = vmatprep.subr.mxu0 0.0
      %702 = vmatpush1.msra.mxu0 %v652
      %703 = vmatprep.subr.mxu0 0.0
      %704 = vmatpush1.msra.mxu0 %v650
      %705 = vmatprep.subr.mxu0 0.0
      %706 = vmatpush1.msra.mxu0 %v648
      %707 = vmatprep.subr.mxu0 0.0
      %708 = vmatpush1.msra.mxu0 %v646
      %709 = vmatprep.subr.mxu0 0.0
      %710 = vmatpush2.msra.mxu0 0.0
      %711 = vmatprep.subr.mxu0 0.0
      %712 = vmatpush2.msra.mxu0 0.0
      %713 = vmatprep.subr.mxu0 0.0
      %714 = vmatpush2.msra.mxu0 0.0
      %715 = vmatprep.subr.mxu0 0.0
      %716 = vmatpush2.msra.mxu0 0.0
      %717 = vmatprep.subr.mxu0 0.0
      %718 = vmatpush2.msra.mxu0 0.0
      %719 = vmatprep.subr.mxu0 0.0
      %720 = vmatpush2.msra.mxu0 0.0
      %721 = vmatprep.subr.mxu0 0.0
      %722 = vmatpush2.msra.mxu0 0.0
      %723 = vmatprep.subr.mxu0 0.0
      %724 = vmatpush2.msra.mxu0 0.0
      %725 = vmatprep.subr.mxu0 0.0
      %726 = vmatpush2.msra.mxu0 0.0
      %727 = vmatprep.subr.mxu0 0.0
      %728 = vmatpush2.msra.mxu0 0.0
      %729 = vmatprep.subr.mxu0 0.0
      %730 = vmatpush2.msra.mxu0 0.0
      %731 = vmatprep.subr.mxu0 0.0
      %732 = vmatpush2.msra.mxu0 0.0
      %733 = vmatprep.subr.mxu0 0.0
      %734 = vmatpush2.msra.mxu0 0.0
      %735 = vmatprep.subr.mxu0 0.0
      %736 = vmatpush2.msra.mxu0 0.0
      %737 = vmatprep.subr.mxu0 0.0
      %738 = vmatpush2.msra.mxu0 0.0
      %739 = vmatprep.subr.mxu0 0.0
      %740 = vmatpush2.msra.mxu0 0.0
      %741 = vmatprep.mubr.f32.mxu0 0.0
      %742 = vmatmul.mubr.f32.gmra.mxu0 %v293
      %v743 = vpop.f32.mrf.mxu0
      %v744 = vadd.f32 0.0, %v743
      %v745 = vpop.f32.mrf.mxu0
      %746 = vmatprep.mubr.f32.mxu0 0.0
      %747 = vmatmul.mubr.f32.gmra.mxu0 %v590
      %v748 = vpop.f32.mrf.mxu0
      %v749 = vadd.f32 0.0, %v748
      %v750 = vpop.f32.mrf.mxu0
      %751 = vdwg.mxu0
      %v752 = vmul.f32 %v293, %v744
      %753 = vadd.xlane.f32.xlu0 %v752
      %v754 = vpop.xlane.xlu0 %753
      %v755 = vmul.f32 %v590, %v744
      %756 = vadd.xlane.f32.xlu0 %v755
      %v757 = vpop.xlane.xlu0 %756
      %v758 = vmul.f32 %v590, %v749
      %759 = vadd.xlane.f32.xlu0 %v758
      %v760 = vpop.xlane.xlu0 %759
      %v761 = vmul.f32 %v295, %v295
      %v762 = vmax.f32 %v761, 1.0
      %v763 = vrcp.pop %v762
      %v764 = vmul.f32 %v754, %v763
      %v765 = vmul.f32 %v757, %v599
      %v766 = vmul.f32 %v592, %v592
      %v767 = vmax.f32 %v766, 1.0
      %v768 = vrcp.pop %v767
      %v769 = vmul.f32 %v760, %v768
      %v770 = vadd.f32 %v764, %v769
      %v771 = vmul.f32 %v765, 2.0
      %v772 = vsub.f32 %v770, %v771
      %v773 = vmax.f32 %v772, 0.0
      %v774 = vsel %vm596, %v773, 0.0
      %v775 = vrot.slane %v774, 4
      %v776 = vadd.f32 %v774, %v775
      %v777 = vrot.slane %v776, 2
      %v778 = vadd.f32 %v776, %v777
      %v779 = vrot.slane %v778, 1
      %v780 = vadd.f32 %v778, %v779
      %v781 = vadd.f32 %v780, 0.0
      %vm782 = vcmp.eq.s32.totalorder %v284, 1
      %v783 = vsel %vm782, 1, 0
      %v784 = vcvt.s32.f32 %v783
      %v786 = vlaneseq
      %v787 = vshrl.u32 %v786, 7
      %v788 = vsub.s32 0, %v787
      %v789 = vrot.slane %v784, %v788
      %v791 = vmul.f32 %v293, %v789
      %792 = vadd.xlane.f32.xlu0 %v791
      %v793 = vpop.xlane.xlu0 %792
      %v794 = vmul.f32 %v791, %v578
      %795 = vadd.xlane.f32.xlu0 %v794
      %v796 = vpop.xlane.xlu0 %795
      %vm797 = vcmp.gt.f32.partialorder %v793, 0.0
      %v798 = vmul.f32 %v295, %v793
      %v799 = vmax.f32 %v798, 1.0
      %v800 = vrcp.pop %v799
      %v801 = vmul.f32 %v796, %v800
      %v802 = vsel %vm797, %v801, 1.0
      %v803 = vmax.f32 %v802, 1e-12
      %v804 = vmul.f32 %v803, 2.0
      %v805 = vrcp.pop %v804
      %v806 = vmul.f32 1.0, %v805
      %v807 = vmul.f32 %v293, %v806
      %v808 = vrot.slane %v807, 4
      %v809 = vadd.f32 %v807, %v808
      %v810 = vrot.slane %v809, 2
      %v811 = vadd.f32 %v809, %v810
      %v812 = vrot.slane %v811, 1
      %v813 = vadd.f32 %v811, %v812
      %v814 = vmul.f32 %v613, %v813
      %v815 = vmul.f32 %v614, %v813
      %v816 = vmul.f32 %v615, %v813
      %v817 = vmul.f32 %v616, %v813
      %v818 = vmul.f32 %v617, %v813
      %v819 = vmul.f32 %v618, %v813
      %v820 = vmul.f32 %v619, %v813
      %v821 = vmul.f32 %v620, %v813
      %v822 = vmul.f32 %v621, %v813
      %v823 = vmul.f32 %v622, %v813
      %v824 = vmul.f32 %v623, %v813
      %v825 = vmul.f32 %v624, %v813
      %v826 = vmul.f32 %v625, %v813
      %v827 = vmul.f32 %v626, %v813
      %v828 = vmul.f32 %v627, %v813
      %v829 = vmul.f32 %v628, %v813
      %v830 = vmul.f32 %v814, 1.442695
      %v831 = vpow.pop %v830
      %v832 = vmul.f32 %v815, 1.442695
      %v833 = vpow.pop %v832
      %v834 = vmul.f32 %v816, 1.442695
      %v835 = vpow.pop %v834
      %v836 = vmul.f32 %v817, 1.442695
      %v837 = vpow.pop %v836
      %v838 = vmul.f32 %v818, 1.442695
      %v839 = vpow.pop %v838
      %v840 = vmul.f32 %v819, 1.442695
      %v841 = vpow.pop %v840
      %v842 = vmul.f32 %v820, 1.442695
      %v843 = vpow.pop %v842
      %v844 = vmul.f32 %v821, 1.442695
      %v845 = vpow.pop %v844
      %v846 = vmul.f32 %v822, 1.442695
      %v847 = vpow.pop %v846
      %v848 = vmul.f32 %v823, 1.442695
      %v849 = vpow.pop %v848
      %v850 = vmul.f32 %v824, 1.442695
      %v851 = vpow.pop %v850
      %v852 = vmul.f32 %v825, 1.442695
      %v853 = vpow.pop %v852
      %v854 = vmul.f32 %v826, 1.442695
      %v855 = vpow.pop %v854
      %v856 = vmul.f32 %v827, 1.442695
      %v857 = vpow.pop %v856
      %v858 = vmul.f32 %v828, 1.442695
      %v859 = vpow.pop %v858
      %v860 = vmul.f32 %v829, 1.442695
      %v861 = vpow.pop %v860
      %862 = vmatprep.subr.mxu0 0.0
      %863 = vmatpush1.msra.mxu0 %v861
      %864 = vmatprep.subr.mxu0 0.0
      %865 = vmatpush1.msra.mxu0 %v859
      %866 = vmatprep.subr.mxu0 0.0
      %867 = vmatpush1.msra.mxu0 %v857
      %868 = vmatprep.subr.mxu0 0.0
      %869 = vmatpush1.msra.mxu0 %v855
      %870 = vmatprep.subr.mxu0 0.0
      %871 = vmatpush1.msra.mxu0 %v853
      %872 = vmatprep.subr.mxu0 0.0
      %873 = vmatpush1.msra.mxu0 %v851
      %874 = vmatprep.subr.mxu0 0.0
      %875 = vmatpush1.msra.mxu0 %v849
      %876 = vmatprep.subr.mxu0 0.0
      %877 = vmatpush1.msra.mxu0 %v847
      %878 = vmatprep.subr.mxu0 0.0
      %879 = vmatpush1.msra.mxu0 %v845
      %880 = vmatprep.subr.mxu0 0.0
      %881 = vmatpush1.msra.mxu0 %v843
      %882 = vmatprep.subr.mxu0 0.0
      %883 = vmatpush1.msra.mxu0 %v841
      %884 = vmatprep.subr.mxu0 0.0
      %885 = vmatpush1.msra.mxu0 %v839
      %886 = vmatprep.subr.mxu0 0.0
      %887 = vmatpush1.msra.mxu0 %v837
      %888 = vmatprep.subr.mxu0 0.0
      %889 = vmatpush1.msra.mxu0 %v835
      %890 = vmatprep.subr.mxu0 0.0
      %891 = vmatpush1.msra.mxu0 %v833
      %892 = vmatprep.subr.mxu0 0.0
      %893 = vmatpush1.msra.mxu0 %v831
      %894 = vmatprep.subr.mxu0 0.0
      %895 = vmatpush2.msra.mxu0 0.0
      %896 = vmatprep.subr.mxu0 0.0
      %897 = vmatpush2.msra.mxu0 0.0
      %898 = vmatprep.subr.mxu0 0.0
      %899 = vmatpush2.msra.mxu0 0.0
      %900 = vmatprep.subr.mxu0 0.0
      %901 = vmatpush2.msra.mxu0 0.0
      %902 = vmatprep.subr.mxu0 0.0
      %903 = vmatpush2.msra.mxu0 0.0
      %904 = vmatprep.subr.mxu0 0.0
      %905 = vmatpush2.msra.mxu0 0.0
      %906 = vmatprep.subr.mxu0 0.0
      %907 = vmatpush2.msra.mxu0 0.0
      %908 = vmatprep.subr.mxu0 0.0
      %909 = vmatpush2.msra.mxu0 0.0
      %910 = vmatprep.subr.mxu0 0.0
      %911 = vmatpush2.msra.mxu0 0.0
      %912 = vmatprep.subr.mxu0 0.0
      %913 = vmatpush2.msra.mxu0 0.0
      %914 = vmatprep.subr.mxu0 0.0
      %915 = vmatpush2.msra.mxu0 0.0
      %916 = vmatprep.subr.mxu0 0.0
      %917 = vmatpush2.msra.mxu0 0.0
      %918 = vmatprep.subr.mxu0 0.0
      %919 = vmatpush2.msra.mxu0 0.0
      %920 = vmatprep.subr.mxu0 0.0
      %921 = vmatpush2.msra.mxu0 0.0
      %922 = vmatprep.subr.mxu0 0.0
      %923 = vmatpush2.msra.mxu0 0.0
      %924 = vmatprep.subr.mxu0 0.0
      %925 = vmatpush2.msra.mxu0 0.0
      %926 = vmatprep.mubr.f32.mxu0 0.0
      %927 = vmatmul.mubr.f32.gmra.mxu0 %v293
      %v928 = vpop.f32.mrf.mxu0
      %v929 = vadd.f32 0.0, %v928
      %v930 = vpop.f32.mrf.mxu0
      %931 = vmatprep.mubr.f32.mxu0 0.0
      %932 = vmatmul.mubr.f32.gmra.mxu0 %v791
      %v933 = vpop.f32.mrf.mxu0
      %v934 = vadd.f32 0.0, %v933
      %v935 = vpop.f32.mrf.mxu0
      %936 = vdwg.mxu0
      %v937 = vmul.f32 %v293, %v929
      %938 = vadd.xlane.f32.xlu0 %v937
      %v939 = vpop.xlane.xlu0 %938
      %v940 = vmul.f32 %v791, %v929
      %941 = vadd.xlane.f32.xlu0 %v940
      %v942 = vpop.xlane.xlu0 %941
      %v943 = vmul.f32 %v791, %v934
      %944 = vadd.xlane.f32.xlu0 %v943
      %v945 = vpop.xlane.xlu0 %944
      %v946 = vmul.f32 %v939, %v763
      %v947 = vmul.f32 %v942, %v800
      %v948 = vmul.f32 %v793, %v793
      %v949 = vmax.f32 %v948, 1.0
      %v950 = vrcp.pop %v949
      %v951 = vmul.f32 %v945, %v950
      %v952 = vadd.f32 %v946, %v951
      %v953 = vmul.f32 %v947, 2.0
      %v954 = vsub.f32 %v952, %v953
      %v955 = vmax.f32 %v954, 0.0
      %v956 = vsel %vm797, %v955, 0.0
      %v957 = vrot.slane %v956, 4
      %v958 = vadd.f32 %v956, %v957
      %v959 = vrot.slane %v958, 2
      %v960 = vadd.f32 %v958, %v959
      %v961 = vrot.slane %v960, 1
      %v962 = vadd.f32 %v960, %v961
      %v963 = vadd.f32 %v781, %v962
      %v964 = vrcp.pop 4.0
      %v965 = vmul.f32 %v963, %v964
      %vm966 = vcmask 0
      %967 = vst.msk [vmem:[#allocation6] sm:$0x1] %vm966, %v965
    $region33: #{tpu_custom_call.1} parent=1 // pred_fallthru
      _
    // Predicated region
    $region34: #{tpu_custom_call.1} parent=1 // pred_check
      _
    $region35: #{tpu_custom_call.1} parent=1 // pred_check_branch
      %969 = sbr.rel (0) target = $region37
    $region36: #{tpu_custom_call.1} parent=1 // pred_region
      %s971 = ssub.s32 16, 16
      %972 = vsyncadd [#allocation5], %s971
      %s974 = sshll.u32 [#allocation6], 4
      %s975 = int_to_ptr.vmem [resolvable:$true] %s974
      %977 = dma.vmem_to_hbm [thread:$0]  %s975, 16, %s5, [#allocation5]
    $region37: #{tpu_custom_call.1} parent=1 // pred_fallthru
      _
    // Predicated region
    $region38: #{tpu_custom_call.1} parent=1 // pred_check
      _
    $region39: #{tpu_custom_call.1} parent=1 // pred_check_branch
      %979 = sbr.rel (0) target = $region41
    $region40: #{tpu_custom_call.1} parent=1 // pred_region
      %980 = dma.done [#allocation5], 16
    $region41: #{tpu_custom_call.1} parent=1 // pred_fallthru
      _
    %981 = vsyncpa [#allocation4], 1
    %982 = vsyncpa [#allocation5], 1

</llo_original>
